<compile_context>
chip_gen: v6e
topology: v6e:2x2x1
jax: 0.10.0
libtpu: 0.0.40
codegen_flags: <defaults>
</compile_context>

<pallas_src>
import functools
import math

import jax
import jax.numpy as jnp
from jax.experimental import pallas as pl
from jax.experimental.pallas import tpu as pltpu


# ---------------------------------------------------------------------------
# Fused kernel: one (batch, query-row-tile) per grid step
# ---------------------------------------------------------------------------

def fused_lora_mha_kernel(x_ref, wq_ref, bq_ref, wk_ref, bk_ref, wv_ref,
                          bv_ref, wo_ref, bo_ref, o_ref,
                          kT_scr, v_scr, attn_scr, *,
                          num_heads, tq, compute_dtype):
    S, E = x_ref.shape[1], x_ref.shape[2]
    H = num_heads
    Dh = E // H
    qi = pl.program_id(1)

    x2d = x_ref.at[0]                       # (S, E) bf16 view of this batch

    # ---- K / V projection: once per batch element (qi == 0); results stay
    #      resident in VMEM scratch across this batch's query-row tiles ------
    @pl.when(qi == 0)
    def _():
        x_full = x2d[...]                                            # (S, E)
        k = jnp.dot(x_full, wk_ref[...],
                    preferred_element_type=jnp.float32) + bk_ref[...]
        v = jnp.dot(x_full, wv_ref[...],
                    preferred_element_type=jnp.float32) + bv_ref[...]
        # stage K transposed once -> no per-head transpose in the attn loop
        kT_scr[...] = k.T.astype(compute_dtype)                      # (E, S)
        v_scr[...] = v.astype(compute_dtype)                         # (S, E)

    # ---- Q projection for this query-row tile (LoRA + 1/sqrt(Dh) already
    #      folded into wq / bq at prep time) ---------------------------------
    row0 = pl.multiple_of(qi * tq, tq)
    x_t = x2d[pl.ds(row0, tq), :]                                    # (tq, E)
    q_t = (jnp.dot(x_t, wq_ref[...], preferred_element_type=jnp.float32)
           + bq_ref[...]).astype(compute_dtype)                      # (tq, E)

    # ---- per-head attention; each head's (tq, Dh) result goes straight into
    #      its column slab of the scratch accumulator ------------------------
    for h in range(H):                                               # static
        lo = h * Dh
        qh = q_t[:, lo:lo + Dh]                                      # (tq,Dh)
        khT = kT_scr[lo:lo + Dh, :]                                  # (Dh, S)
        vh = v_scr[:, lo:lo + Dh]                                    # (S, Dh)
        s = jnp.dot(qh, khT, preferred_element_type=jnp.float32)     # (tq, S)
        m = jnp.max(s, axis=-1, keepdims=True)
        p = jnp.exp(s - m)                                           # f32
        p = p * pl.reciprocal(jnp.sum(p, axis=-1, keepdims=True), approx=True)
        attn_scr[:, lo:lo + Dh] = jnp.dot(p.astype(compute_dtype), vh,
                                          preferred_element_type=jnp.float32)

    # ---- single lane-dense (tq, E) x (E, E) output projection ---------------
    out = jnp.dot(attn_scr[...].astype(compute_dtype), wo_ref[...],
                  preferred_element_type=jnp.float32) + bo_ref[...]
    o_ref[0] = out.astype(o_ref.dtype)


# ---------------------------------------------------------------------------
# One-time parameter preprocessing:
#   pre-transpose, fold LoRA into W_q / W_v (f32), fold 1/sqrt(Dh) into q,
#   single bf16 cast.
# ---------------------------------------------------------------------------

def prepare_params(params, *, num_heads, lora_scaling,
                   compute_dtype=jnp.bfloat16):
    w_qkv = jnp.asarray(params["w_qkv"], jnp.float32)       # (3E, E)
    b_qkv = jnp.asarray(params["b_qkv"], jnp.float32)       # (1, 3E)
    E = w_qkv.shape[1]
    Dh = E // num_heads
    sm_scale = 1.0 / math.sqrt(Dh)

    w_q = w_qkv[:E].T                                       # (E, E)
    w_k = w_qkv[E:2 * E].T
    w_v = w_qkv[2 * E:].T

    # inference-time LoRA fold, done in f32 before the single bf16 cast
    w_q = w_q + lora_scaling * (jnp.asarray(params["a_q"], jnp.float32).T
                                @ jnp.asarray(params["b_q"], jnp.float32).T)
    w_v = w_v + lora_scaling * (jnp.asarray(params["a_v"], jnp.float32).T
                                @ jnp.asarray(params["b_v"], jnp.float32).T)

    # fold the softmax scale into the q projection
    w_q = w_q * sm_scale

    return {
        "w_q_t": w_q.astype(compute_dtype),                 # (E, E) bf16
        "b_q":   b_qkv[:, :E] * sm_scale,                   # (1, E) f32
        "w_k_t": w_k.astype(compute_dtype),                 # (E, E) bf16
        "b_k":   b_qkv[:, E:2 * E],                         # (1, E) f32
        "w_v_t": w_v.astype(compute_dtype),                 # (E, E) bf16
        "b_v":   b_qkv[:, 2 * E:],                          # (1, E) f32
        "w_o_t": jnp.asarray(params["w_o"],
                             jnp.float32).T.astype(compute_dtype),  # (E, E)
        "b_o":   jnp.asarray(params["b_o"], jnp.float32),   # (1, E) f32
    }


# ---------------------------------------------------------------------------
# Forward wrapper
# ---------------------------------------------------------------------------

def _pick_q_tile(S):
    for tq in (256, 128):
        if S > tq and S % tq == 0:
            return tq
    return S


def lora_mha_forward(query, prepped, *, num_heads):
    """query: (B, S, E) batch-first activations.  Returns (B, S, E) float32."""
    B, S, E = query.shape
    compute_dtype = prepped["w_q_t"].dtype
    tq = _pick_q_tile(S)
    n_qt = S // tq

    x = query.astype(compute_dtype)          # bf16 activations at the boundary

    kernel = functools.partial(fused_lora_mha_kernel, num_heads=num_heads,
                               tq=tq, compute_dtype=compute_dtype)

    def resident(arr):   # full-array block, constant index -> fetched once
        zeros = (0,) * arr.ndim
        return pl.BlockSpec(arr.shape, lambda b, qi: zeros)

    x_spec = pl.BlockSpec((1, S, E), lambda b, qi: (b, 0, 0))
    o_spec = pl.BlockSpec((1, tq, E), lambda b, qi: (b, qi, 0))

    # scoped-VMEM budget from the actual footprint (weights possibly double
    # buffered + pipelined activation/output blocks + scratch + headroom),
    # clamped to [32, 40] MiB: safe on v7x (64 MiB), > v5e's 16 MiB default.
    bpe = 2  # bf16
    need = (2 * (4 * E * E * bpe + 4 * E * 4)
            + 2 * (S * E * bpe) + 2 * (tq * E * 4)
            + 2 * (S * E * bpe) + tq * E * 4
            + (4 << 20))
    vmem_limit = int(min(max(need, 32 << 20), 40 << 20))

    return pl.pallas_call(
        kernel,
        out_shape=jax.ShapeDtypeStruct((B, S, E), jnp.float32),
        grid=(B, n_qt),
        in_specs=[x_spec,
                  resident(prepped["w_q_t"]), resident(prepped["b_q"]),
                  resident(prepped["w_k_t"]), resident(prepped["b_k"]),
                  resident(prepped["w_v_t"]), resident(prepped["b_v"]),
                  resident(prepped["w_o_t"]), resident(prepped["b_o"])],
        out_specs=o_spec,
        scratch_shapes=[
            pltpu.VMEM((E, S), compute_dtype),   # K^T, resident per batch
            pltpu.VMEM((S, E), compute_dtype),   # V,   resident per batch
            pltpu.VMEM((tq, E), jnp.float32),    # per-tile attention output
        ],
        compiler_params=pltpu.CompilerParams(
            # batch axis independent -> shards across v7x's 2 TensorCores;
            # query-tile axis is sequential (reads scratch written at qi==0).
            dimension_semantics=("parallel", "arbitrary"),
            vmem_limit_bytes=vmem_limit,
        ),
    )(x, prepped["w_q_t"], prepped["b_q"], prepped["w_k_t"], prepped["b_k"],
      prepped["w_v_t"], prepped["b_v"], prepped["w_o_t"], prepped["b_o"])


# ---------------------------------------------------------------------------
# Pure-JAX f32 reference (unfolded LoRA) for correctness check
# ---------------------------------------------------------------------------

def reference_forward(query, params, *, num_heads, lora_scaling):
    B, S, E = query.shape
    H = num_heads
    Dh = E // H
    x2d = query.reshape(B * S, E)

    qkv = x2d @ params["w_qkv"].T + params["b_qkv"][0]
    dq = (x2d @ params["a_q"].T) @ params["b_q"].T * lora_scaling
    dv = (x2d @ params["a_v"].T) @ params["b_v"].T * lora_scaling
    qkv = qkv + jnp.concatenate([dq, jnp.zeros_like(dq), dv], axis=-1)

    q, k, v = jnp.split(qkv, 3, axis=-1)

    def to_heads(t):
        return t.reshape(B, S, H, Dh).transpose(0, 2, 1, 3)

    q, k, v = map(to_heads, (q, k, v))
    s = jnp.einsum("bhqd,bhkd->bhqk", q, k) / math.sqrt(Dh)
    p = jax.nn.softmax(s, axis=-1)
    o = jnp.einsum("bhqk,bhkd->bhqd", p, v)
    o = o.transpose(0, 2, 1, 3).reshape(B * S, E)
    out = o @ params["w_o"].T + params["b_o"][0]
    return out.reshape(B, S, E)


# ---------------------------------------------------------------------------
# Main
# ---------------------------------------------------------------------------

if __name__ == "__main__":
    # Small shapes consistent with the module's __init__ assumptions.
    B, S = 2, 8
    embed_dim = 32
    num_heads = 4
    lora_r = 4
    lora_alpha = 8
    lora_scaling = lora_alpha / lora_r          # loralib MergedLinear scaling
    # (lora_dropout / attention dropout are identity in inference mode)

    key = jax.random.PRNGKey(0)
    keys = jax.random.split(key, 8)

    params = {
        # nn.Linear-style (out_features, in_features) weights
        "w_qkv": 0.02 * jax.random.normal(keys[0], (3 * embed_dim, embed_dim),
                                          jnp.float32),
        "b_qkv": 0.01 * jax.random.normal(keys[1], (1, 3 * embed_dim),
                                          jnp.float32),
        # LoRA A: (r, in), LoRA B: (out, r) for the q and v groups
        "a_q": 0.05 * jax.random.normal(keys[2], (lora_r, embed_dim), jnp.float32),
        "b_q": 0.05 * jax.random.normal(keys[3], (embed_dim, lora_r), jnp.float32),
        "a_v": 0.05 * jax.random.normal(keys[4], (lora_r, embed_dim), jnp.float32),
        "b_v": 0.05 * jax.random.normal(keys[5], (embed_dim, lora_r), jnp.float32),
        # output projection
        "w_o": 0.02 * jax.random.normal(keys[6], (embed_dim, embed_dim),
                                        jnp.float32),
        "b_o": 0.01 * jax.random.normal(keys[7], (1, embed_dim), jnp.float32),
    }

    # query: (B, S, E) batch-first activations
    query = jax.random.normal(jax.random.PRNGKey(42), (B, S, embed_dim),
                              jnp.float32)

    prepped = prepare_params(params, num_heads=num_heads,
                             lora_scaling=lora_scaling,
                             compute_dtype=jnp.bfloat16)

    out = lora_mha_forward(query, prepped, num_heads=num_heads)
    out = jax.block_until_ready(out)

    ref = reference_forward(query, params, num_heads=num_heads,
                            lora_scaling=lora_scaling)
    ref = jax.block_until_ready(ref)

    assert out.shape == (B, S, embed_dim)
    max_err = jnp.max(jnp.abs(out - ref))
    # bf16 MXU inputs with f32 accumulation; softmax in f32.
    assert jnp.allclose(out, ref, rtol=1e-2, atol=1e-2), (
        f"max abs err = {max_err}")

    print("KERNEL_OK")
</pallas_src>

<mosaic_0001>
module attributes {stable_mosaic.version = 11 : i64} {
  func.func @fused_lora_mha_kernel(%arg0: i32, %arg1: i32, %arg2: memref<1x8x32xbf16, #tpu.memory_space<vmem>>, %arg3: memref<32x32xbf16, #tpu.memory_space<vmem>>, %arg4: memref<1x32xf32, #tpu.memory_space<vmem>>, %arg5: memref<32x32xbf16, #tpu.memory_space<vmem>>, %arg6: memref<1x32xf32, #tpu.memory_space<vmem>>, %arg7: memref<32x32xbf16, #tpu.memory_space<vmem>>, %arg8: memref<1x32xf32, #tpu.memory_space<vmem>>, %arg9: memref<32x32xbf16, #tpu.memory_space<vmem>>, %arg10: memref<1x32xf32, #tpu.memory_space<vmem>>, %arg11: memref<1x8x32xf32, #tpu.memory_space<vmem>>, %arg12: memref<32x8xbf16, #tpu.memory_space<vmem>>, %arg13: memref<8x32xbf16, #tpu.memory_space<vmem>>, %arg14: memref<8x32xf32, #tpu.memory_space<vmem>>) attributes {dimension_semantics = [#tpu.dimension_semantics<parallel>, #tpu.dimension_semantics<arbitrary>], iteration_bounds = array<i64: 2, 1>, scalar_prefetch = 0 : i64, scratch_operands = 3 : i64, tpu.core_type = #tpu.core_type<tc>, window_params = [{transform_indices = @transform_0, window_bounds = array<i64: 1, 8, 32>}, {pipeline_mode = #tpu.pipeline_mode<synchronous>, transform_indices = @transform_1, window_bounds = array<i64: 32, 32>}, {pipeline_mode = #tpu.pipeline_mode<synchronous>, transform_indices = @transform_2, window_bounds = array<i64: 1, 32>}, {pipeline_mode = #tpu.pipeline_mode<synchronous>, transform_indices = @transform_3, window_bounds = array<i64: 32, 32>}, {pipeline_mode = #tpu.pipeline_mode<synchronous>, transform_indices = @transform_4, window_bounds = array<i64: 1, 32>}, {pipeline_mode = #tpu.pipeline_mode<synchronous>, transform_indices = @transform_5, window_bounds = array<i64: 32, 32>}, {pipeline_mode = #tpu.pipeline_mode<synchronous>, transform_indices = @transform_6, window_bounds = array<i64: 1, 32>}, {pipeline_mode = #tpu.pipeline_mode<synchronous>, transform_indices = @transform_7, window_bounds = array<i64: 32, 32>}, {pipeline_mode = #tpu.pipeline_mode<synchronous>, transform_indices = @transform_8, window_bounds = array<i64: 1, 32>}, {transform_indices = @transform_9, window_bounds = array<i64: 1, 8, 32>}]} {
    %c0_i32 = arith.constant 0 : i32
    %0 = arith.cmpi eq, %arg1, %c0_i32 : i32
    %1 = arith.extui %0 : i1 to i32
    %c0_i32_0 = arith.constant 0 : i32
    %c0_i32_1 = arith.constant 0 : i32
    %2 = arith.cmpi ne, %1, %c0_i32_1 : i32
    scf.if %2 {
      %93 = arith.index_cast %c0_i32_0 : i32 to index
      %c0_56 = arith.constant 0 : index
      %c0_57 = arith.constant 0 : index
      %94 = vector.load %arg2[%93, %c0_56, %c0_57] : memref<1x8x32xbf16, #tpu.memory_space<vmem>>, vector<1x8x32xbf16>
      %95 = vector.shape_cast %94 : vector<1x8x32xbf16> to vector<8x32xbf16>
      %c0_58 = arith.constant 0 : index
      %c0_59 = arith.constant 0 : index
      %96 = vector.load %arg5[%c0_58, %c0_59] : memref<32x32xbf16, #tpu.memory_space<vmem>>, vector<32x32xbf16>
      %cst_60 = arith.constant dense<0.000000e+00> : vector<8x32xf32>
      %97 = tpu.matmul %95, %96, %cst_60 {dimension_numbers = #tpu.dot_dimension_numbers<[1], [0], [0], [1], [0, 0, 1, 1], [], []>} : vector<8x32xbf16>, vector<32x32xbf16>, vector<8x32xf32> -> vector<8x32xf32>
      %c0_61 = arith.constant 0 : index
      %c0_62 = arith.constant 0 : index
      %98 = vector.load %arg6[%c0_61, %c0_62] : memref<1x32xf32, #tpu.memory_space<vmem>>, vector<1x32xf32>
      %99 = vector.broadcast %98 : vector<1x32xf32> to vector<8x32xf32>
      %100 = arith.addf %97, %99 : vector<8x32xf32>
      %c0_63 = arith.constant 0 : index
      %c0_64 = arith.constant 0 : index
      %101 = vector.load %arg7[%c0_63, %c0_64] : memref<32x32xbf16, #tpu.memory_space<vmem>>, vector<32x32xbf16>
      %cst_65 = arith.constant dense<0.000000e+00> : vector<8x32xf32>
      %102 = tpu.matmul %95, %101, %cst_65 {dimension_numbers = #tpu.dot_dimension_numbers<[1], [0], [0], [1], [0, 0, 1, 1], [], []>} : vector<8x32xbf16>, vector<32x32xbf16>, vector<8x32xf32> -> vector<8x32xf32>
      %c0_66 = arith.constant 0 : index
      %c0_67 = arith.constant 0 : index
      %103 = vector.load %arg8[%c0_66, %c0_67] : memref<1x32xf32, #tpu.memory_space<vmem>>, vector<1x32xf32>
      %104 = vector.broadcast %103 : vector<1x32xf32> to vector<8x32xf32>
      %105 = arith.addf %102, %104 : vector<8x32xf32>
      %106 = tpu.transpose %100, [1, 0] : vector<8x32xf32> -> vector<32x8xf32>
      %107 = arith.truncf %106 : vector<32x8xf32> to vector<32x8xbf16>
      %c0_68 = arith.constant 0 : index
      %c0_69 = arith.constant 0 : index
      %108 = vector.load %arg12[%c0_68, %c0_69] : memref<32x8xbf16, #tpu.memory_space<vmem>>, vector<32x8xbf16>
      tpu.vector_store %arg12[%c0_68, %c0_69], %107 {strides = array<i32>} : memref<32x8xbf16, #tpu.memory_space<vmem>>, vector<32x8xbf16>,
      %109 = arith.truncf %105 : vector<8x32xf32> to vector<8x32xbf16>
      %c0_70 = arith.constant 0 : index
      %c0_71 = arith.constant 0 : index
      %110 = vector.load %arg13[%c0_70, %c0_71] : memref<8x32xbf16, #tpu.memory_space<vmem>>, vector<8x32xbf16>
      tpu.vector_store %arg13[%c0_70, %c0_71], %109 {strides = array<i32>} : memref<8x32xbf16, #tpu.memory_space<vmem>>, vector<8x32xbf16>,
    } else {
    }
    %c8_i32 = arith.constant 8 : i32
    %3 = arith.muli %arg1, %c8_i32 : i32
    %4 = tpu.assume_multiple %3, 8 : i32
    %c0_i32_2 = arith.constant 0 : i32
    %c0_i32_3 = arith.constant 0 : i32
    %c0_i32_4 = arith.constant 0 : i32
    %5 = tpu.memref_slice %arg2[%c0_i32_2, %c0_i32_3, %c0_i32_4] : memref<1x8x32xbf16, #tpu.memory_space<vmem>> -> memref<1x8x32xbf16, #tpu.memory_space<vmem>>
    %6 = tpu.memref_squeeze %5 : memref<1x8x32xbf16, #tpu.memory_space<vmem>> -> memref<8x32xbf16, #tpu.memory_space<vmem>>
    %7 = arith.index_cast %4 : i32 to index
    %c0 = arith.constant 0 : index
    %8 = vector.load %6[%7, %c0] : memref<8x32xbf16, #tpu.memory_space<vmem>>, vector<8x32xbf16>
    %c0_5 = arith.constant 0 : index
    %c0_6 = arith.constant 0 : index
    %9 = vector.load %arg3[%c0_5, %c0_6] : memref<32x32xbf16, #tpu.memory_space<vmem>>, vector<32x32xbf16>
    %cst = arith.constant dense<0.000000e+00> : vector<8x32xf32>
    %10 = tpu.matmul %8, %9, %cst {dimension_numbers = #tpu.dot_dimension_numbers<[1], [0], [0], [1], [0, 0, 1, 1], [], []>} : vector<8x32xbf16>, vector<32x32xbf16>, vector<8x32xf32> -> vector<8x32xf32>
    %c0_7 = arith.constant 0 : index
    %c0_8 = arith.constant 0 : index
    %11 = vector.load %arg4[%c0_7, %c0_8] : memref<1x32xf32, #tpu.memory_space<vmem>>, vector<1x32xf32>
    %12 = vector.broadcast %11 : vector<1x32xf32> to vector<8x32xf32>
    %13 = arith.addf %10, %12 : vector<8x32xf32>
    %14 = arith.truncf %13 : vector<8x32xf32> to vector<8x32xbf16>
    %15 = vector.extract_strided_slice %14 {offsets = [0, 0], sizes = [8, 8], strides = [1, 1]} : vector<8x32xbf16> to vector<8x8xbf16>
    %c0_9 = arith.constant 0 : index
    %c0_10 = arith.constant 0 : index
    %16 = vector.load %arg12[%c0_9, %c0_10] : memref<32x8xbf16, #tpu.memory_space<vmem>>, vector<8x8xbf16>
    %c0_11 = arith.constant 0 : index
    %c0_12 = arith.constant 0 : index
    %17 = vector.load %arg13[%c0_11, %c0_12] : memref<8x32xbf16, #tpu.memory_space<vmem>>, vector<8x8xbf16>
    %cst_13 = arith.constant dense<0.000000e+00> : vector<8x8xf32>
    %18 = tpu.matmul %15, %16, %cst_13 {dimension_numbers = #tpu.dot_dimension_numbers<[1], [0], [0], [1], [0, 0, 1, 1], [], []>} : vector<8x8xbf16>, vector<8x8xbf16>, vector<8x8xf32> -> vector<8x8xf32>
    %cst_14 = arith.constant dense<0xFF800000> : vector<8xf32>
    %19 = vector.multi_reduction <maximumf>, %18, %cst_14 [1] : vector<8x8xf32> to vector<8xf32>
    %20 = vector.shape_cast %19 : vector<8xf32> to vector<8x1xf32>
    %21 = vector.broadcast %20 : vector<8x1xf32> to vector<8x8xf32>
    %22 = arith.subf %18, %21 : vector<8x8xf32>
    %23 = math.exp %22 : vector<8x8xf32>
    %cst_15 = arith.constant dense<0.000000e+00> : vector<8xf32>
    %24 = vector.multi_reduction <add>, %23, %cst_15 [1] : vector<8x8xf32> to vector<8xf32>
    %25 = vector.shape_cast %24 : vector<8xf32> to vector<8x1xf32>
    %26 = tpu.reciprocal %25 {approx = true} : vector<8x1xf32> -> vector<8x1xf32>
    %27 = vector.broadcast %26 : vector<8x1xf32> to vector<8x8xf32>
    %28 = arith.mulf %23, %27 : vector<8x8xf32>
    %29 = arith.truncf %28 : vector<8x8xf32> to vector<8x8xbf16>
    %cst_16 = arith.constant dense<0.000000e+00> : vector<8x8xf32>
    %30 = tpu.matmul %29, %17, %cst_16 {dimension_numbers = #tpu.dot_dimension_numbers<[1], [0], [0], [1], [0, 0, 1, 1], [], []>} : vector<8x8xbf16>, vector<8x8xbf16>, vector<8x8xf32> -> vector<8x8xf32>
    %c0_17 = arith.constant 0 : index
    %c0_18 = arith.constant 0 : index
    %31 = vector.load %arg14[%c0_17, %c0_18] : memref<8x32xf32, #tpu.memory_space<vmem>>, vector<8x8xf32>
    tpu.vector_store %arg14[%c0_17, %c0_18], %30 {strides = array<i32>} : memref<8x32xf32, #tpu.memory_space<vmem>>, vector<8x8xf32>,
    %32 = vector.extract_strided_slice %14 {offsets = [0, 8], sizes = [8, 8], strides = [1, 1]} : vector<8x32xbf16> to vector<8x8xbf16>
    %c8 = arith.constant 8 : index
    %c0_19 = arith.constant 0 : index
    %33 = vector.load %arg12[%c8, %c0_19] : memref<32x8xbf16, #tpu.memory_space<vmem>>, vector<8x8xbf16>
    %c0_20 = arith.constant 0 : index
    %c8_21 = arith.constant 8 : index
    %34 = vector.load %arg13[%c0_20, %c8_21] : memref<8x32xbf16, #tpu.memory_space<vmem>>, vector<8x8xbf16>
    %cst_22 = arith.constant dense<0.000000e+00> : vector<8x8xf32>
    %35 = tpu.matmul %32, %33, %cst_22 {dimension_numbers = #tpu.dot_dimension_numbers<[1], [0], [0], [1], [0, 0, 1, 1], [], []>} : vector<8x8xbf16>, vector<8x8xbf16>, vector<8x8xf32> -> vector<8x8xf32>
    %cst_23 = arith.constant dense<0xFF800000> : vector<8xf32>
    %36 = vector.multi_reduction <maximumf>, %35, %cst_23 [1] : vector<8x8xf32> to vector<8xf32>
    %37 = vector.shape_cast %36 : vector<8xf32> to vector<8x1xf32>
    %38 = vector.broadcast %37 : vector<8x1xf32> to vector<8x8xf32>
    %39 = arith.subf %35, %38 : vector<8x8xf32>
    %40 = math.exp %39 : vector<8x8xf32>
    %cst_24 = arith.constant dense<0.000000e+00> : vector<8xf32>
    %41 = vector.multi_reduction <add>, %40, %cst_24 [1] : vector<8x8xf32> to vector<8xf32>
    %42 = vector.shape_cast %41 : vector<8xf32> to vector<8x1xf32>
    %43 = tpu.reciprocal %42 {approx = true} : vector<8x1xf32> -> vector<8x1xf32>
    %44 = vector.broadcast %43 : vector<8x1xf32> to vector<8x8xf32>
    %45 = arith.mulf %40, %44 : vector<8x8xf32>
    %46 = arith.truncf %45 : vector<8x8xf32> to vector<8x8xbf16>
    %cst_25 = arith.constant dense<0.000000e+00> : vector<8x8xf32>
    %47 = tpu.matmul %46, %34, %cst_25 {dimension_numbers = #tpu.dot_dimension_numbers<[1], [0], [0], [1], [0, 0, 1, 1], [], []>} : vector<8x8xbf16>, vector<8x8xbf16>, vector<8x8xf32> -> vector<8x8xf32>
    %c0_26 = arith.constant 0 : index
    %c8_27 = arith.constant 8 : index
    %48 = vector.load %arg14[%c0_26, %c8_27] : memref<8x32xf32, #tpu.memory_space<vmem>>, vector<8x8xf32>
    tpu.vector_store %arg14[%c0_26, %c8_27], %47 {strides = array<i32>} : memref<8x32xf32, #tpu.memory_space<vmem>>, vector<8x8xf32>,
    %49 = vector.extract_strided_slice %14 {offsets = [0, 16], sizes = [8, 8], strides = [1, 1]} : vector<8x32xbf16> to vector<8x8xbf16>
    %c16 = arith.constant 16 : index
    %c0_28 = arith.constant 0 : index
    %50 = vector.load %arg12[%c16, %c0_28] : memref<32x8xbf16, #tpu.memory_space<vmem>>, vector<8x8xbf16>
    %c0_29 = arith.constant 0 : index
    %c16_30 = arith.constant 16 : index
    %51 = vector.load %arg13[%c0_29, %c16_30] : memref<8x32xbf16, #tpu.memory_space<vmem>>, vector<8x8xbf16>
    %cst_31 = arith.constant dense<0.000000e+00> : vector<8x8xf32>
    %52 = tpu.matmul %49, %50, %cst_31 {dimension_numbers = #tpu.dot_dimension_numbers<[1], [0], [0], [1], [0, 0, 1, 1], [], []>} : vector<8x8xbf16>, vector<8x8xbf16>, vector<8x8xf32> -> vector<8x8xf32>
    %cst_32 = arith.constant dense<0xFF800000> : vector<8xf32>
    %53 = vector.multi_reduction <maximumf>, %52, %cst_32 [1] : vector<8x8xf32> to vector<8xf32>
    %54 = vector.shape_cast %53 : vector<8xf32> to vector<8x1xf32>
    %55 = vector.broadcast %54 : vector<8x1xf32> to vector<8x8xf32>
    %56 = arith.subf %52, %55 : vector<8x8xf32>
    %57 = math.exp %56 : vector<8x8xf32>
    %cst_33 = arith.constant dense<0.000000e+00> : vector<8xf32>
    %58 = vector.multi_reduction <add>, %57, %cst_33 [1] : vector<8x8xf32> to vector<8xf32>
    %59 = vector.shape_cast %58 : vector<8xf32> to vector<8x1xf32>
    %60 = tpu.reciprocal %59 {approx = true} : vector<8x1xf32> -> vector<8x1xf32>
    %61 = vector.broadcast %60 : vector<8x1xf32> to vector<8x8xf32>
    %62 = arith.mulf %57, %61 : vector<8x8xf32>
    %63 = arith.truncf %62 : vector<8x8xf32> to vector<8x8xbf16>
    %cst_34 = arith.constant dense<0.000000e+00> : vector<8x8xf32>
    %64 = tpu.matmul %63, %51, %cst_34 {dimension_numbers = #tpu.dot_dimension_numbers<[1], [0], [0], [1], [0, 0, 1, 1], [], []>} : vector<8x8xbf16>, vector<8x8xbf16>, vector<8x8xf32> -> vector<8x8xf32>
    %c0_35 = arith.constant 0 : index
    %c16_36 = arith.constant 16 : index
    %65 = vector.load %arg14[%c0_35, %c16_36] : memref<8x32xf32, #tpu.memory_space<vmem>>, vector<8x8xf32>
    tpu.vector_store %arg14[%c0_35, %c16_36], %64 {strides = array<i32>} : memref<8x32xf32, #tpu.memory_space<vmem>>, vector<8x8xf32>,
    %66 = vector.extract_strided_slice %14 {offsets = [0, 24], sizes = [8, 8], strides = [1, 1]} : vector<8x32xbf16> to vector<8x8xbf16>
    %c24 = arith.constant 24 : index
    %c0_37 = arith.constant 0 : index
    %67 = vector.load %arg12[%c24, %c0_37] : memref<32x8xbf16, #tpu.memory_space<vmem>>, vector<8x8xbf16>
    %c0_38 = arith.constant 0 : index
    %c24_39 = arith.constant 24 : index
    %68 = vector.load %arg13[%c0_38, %c24_39] : memref<8x32xbf16, #tpu.memory_space<vmem>>, vector<8x8xbf16>
    %cst_40 = arith.constant dense<0.000000e+00> : vector<8x8xf32>
    %69 = tpu.matmul %66, %67, %cst_40 {dimension_numbers = #tpu.dot_dimension_numbers<[1], [0], [0], [1], [0, 0, 1, 1], [], []>} : vector<8x8xbf16>, vector<8x8xbf16>, vector<8x8xf32> -> vector<8x8xf32>
    %cst_41 = arith.constant dense<0xFF800000> : vector<8xf32>
    %70 = vector.multi_reduction <maximumf>, %69, %cst_41 [1] : vector<8x8xf32> to vector<8xf32>
    %71 = vector.shape_cast %70 : vector<8xf32> to vector<8x1xf32>
    %72 = vector.broadcast %71 : vector<8x1xf32> to vector<8x8xf32>
    %73 = arith.subf %69, %72 : vector<8x8xf32>
    %74 = math.exp %73 : vector<8x8xf32>
    %cst_42 = arith.constant dense<0.000000e+00> : vector<8xf32>
    %75 = vector.multi_reduction <add>, %74, %cst_42 [1] : vector<8x8xf32> to vector<8xf32>
    %76 = vector.shape_cast %75 : vector<8xf32> to vector<8x1xf32>
    %77 = tpu.reciprocal %76 {approx = true} : vector<8x1xf32> -> vector<8x1xf32>
    %78 = vector.broadcast %77 : vector<8x1xf32> to vector<8x8xf32>
    %79 = arith.mulf %74, %78 : vector<8x8xf32>
    %80 = arith.truncf %79 : vector<8x8xf32> to vector<8x8xbf16>
    %cst_43 = arith.constant dense<0.000000e+00> : vector<8x8xf32>
    %81 = tpu.matmul %80, %68, %cst_43 {dimension_numbers = #tpu.dot_dimension_numbers<[1], [0], [0], [1], [0, 0, 1, 1], [], []>} : vector<8x8xbf16>, vector<8x8xbf16>, vector<8x8xf32> -> vector<8x8xf32>
    %c0_44 = arith.constant 0 : index
    %c24_45 = arith.constant 24 : index
    %82 = vector.load %arg14[%c0_44, %c24_45] : memref<8x32xf32, #tpu.memory_space<vmem>>, vector<8x8xf32>
    tpu.vector_store %arg14[%c0_44, %c24_45], %81 {strides = array<i32>} : memref<8x32xf32, #tpu.memory_space<vmem>>, vector<8x8xf32>,
    %c0_46 = arith.constant 0 : index
    %c0_47 = arith.constant 0 : index
    %83 = vector.load %arg14[%c0_46, %c0_47] : memref<8x32xf32, #tpu.memory_space<vmem>>, vector<8x32xf32>
    %84 = arith.truncf %83 : vector<8x32xf32> to vector<8x32xbf16>
    %c0_48 = arith.constant 0 : index
    %c0_49 = arith.constant 0 : index
    %85 = vector.load %arg9[%c0_48, %c0_49] : memref<32x32xbf16, #tpu.memory_space<vmem>>, vector<32x32xbf16>
    %cst_50 = arith.constant dense<0.000000e+00> : vector<8x32xf32>
    %86 = tpu.matmul %84, %85, %cst_50 {dimension_numbers = #tpu.dot_dimension_numbers<[1], [0], [0], [1], [0, 0, 1, 1], [], []>} : vector<8x32xbf16>, vector<32x32xbf16>, vector<8x32xf32> -> vector<8x32xf32>
    %c0_51 = arith.constant 0 : index
    %c0_52 = arith.constant 0 : index
    %87 = vector.load %arg10[%c0_51, %c0_52] : memref<1x32xf32, #tpu.memory_space<vmem>>, vector<1x32xf32>
    %88 = vector.broadcast %87 : vector<1x32xf32> to vector<8x32xf32>
    %89 = arith.addf %86, %88 : vector<8x32xf32>
    %c0_53 = arith.constant 0 : index
    %c0_54 = arith.constant 0 : index
    %c0_55 = arith.constant 0 : index
    %90 = vector.load %arg11[%c0_53, %c0_54, %c0_55] : memref<1x8x32xf32, #tpu.memory_space<vmem>>, vector<1x8x32xf32>
    %91 = vector.shape_cast %90 : vector<1x8x32xf32> to vector<8x32xf32>
    %92 = vector.shape_cast %89 : vector<8x32xf32> to vector<1x8x32xf32>
    tpu.vector_store %arg11[%c0_53, %c0_54, %c0_55], %92 {strides = array<i32>} : memref<1x8x32xf32, #tpu.memory_space<vmem>>, vector<1x8x32xf32>,
    return
  }
  func.func @transform_0(%arg0: i32, %arg1: i32) -> (i32, i32, i32) {
    %c0_i32 = arith.constant 0 : i32
    %c0_i32_0 = arith.constant 0 : i32
    %c0_i32_1 = arith.constant 0 : i32
    return %arg0, %c0_i32, %c0_i32_0 : i32, i32, i32
  }
  func.func @transform_1(%arg0: i32, %arg1: i32) -> (i32, i32) {
    %c0_i32 = arith.constant 0 : i32
    %c0_i32_0 = arith.constant 0 : i32
    %c0_i32_1 = arith.constant 0 : i32
    return %c0_i32, %c0_i32_0 : i32, i32
  }
  func.func @transform_2(%arg0: i32, %arg1: i32) -> (i32, i32) {
    %c0_i32 = arith.constant 0 : i32
    %c0_i32_0 = arith.constant 0 : i32
    %c0_i32_1 = arith.constant 0 : i32
    return %c0_i32, %c0_i32_0 : i32, i32
  }
  func.func @transform_3(%arg0: i32, %arg1: i32) -> (i32, i32) {
    %c0_i32 = arith.constant 0 : i32
    %c0_i32_0 = arith.constant 0 : i32
    %c0_i32_1 = arith.constant 0 : i32
    return %c0_i32, %c0_i32_0 : i32, i32
  }
  func.func @transform_4(%arg0: i32, %arg1: i32) -> (i32, i32) {
    %c0_i32 = arith.constant 0 : i32
    %c0_i32_0 = arith.constant 0 : i32
    %c0_i32_1 = arith.constant 0 : i32
    return %c0_i32, %c0_i32_0 : i32, i32
  }
  func.func @transform_5(%arg0: i32, %arg1: i32) -> (i32, i32) {
    %c0_i32 = arith.constant 0 : i32
    %c0_i32_0 = arith.constant 0 : i32
    %c0_i32_1 = arith.constant 0 : i32
    return %c0_i32, %c0_i32_0 : i32, i32
  }
  func.func @transform_6(%arg0: i32, %arg1: i32) -> (i32, i32) {
    %c0_i32 = arith.constant 0 : i32
    %c0_i32_0 = arith.constant 0 : i32
    %c0_i32_1 = arith.constant 0 : i32
    return %c0_i32, %c0_i32_0 : i32, i32
  }
  func.func @transform_7(%arg0: i32, %arg1: i32) -> (i32, i32) {
    %c0_i32 = arith.constant 0 : i32
    %c0_i32_0 = arith.constant 0 : i32
    %c0_i32_1 = arith.constant 0 : i32
    return %c0_i32, %c0_i32_0 : i32, i32
  }
  func.func @transform_8(%arg0: i32, %arg1: i32) -> (i32, i32) {
    %c0_i32 = arith.constant 0 : i32
    %c0_i32_0 = arith.constant 0 : i32
    %c0_i32_1 = arith.constant 0 : i32
    return %c0_i32, %c0_i32_0 : i32, i32
  }
  func.func @transform_9(%arg0: i32, %arg1: i32) -> (i32, i32, i32) {
    %c0_i32 = arith.constant 0 : i32
    %c0_i32_0 = arith.constant 0 : i32
    return %arg0, %arg1, %c0_i32 : i32, i32, i32
  }
}

</mosaic_0001>

<llo_original>
// kernel: tpu_custom_call.1
$region0: #{tpu_custom_call.1}
  #allocation0 [shape = 'u32[]', space=smem, size = 0x4, offset = 0x4, fixed_abs, tag = 'smem constant byte address 0x4 - core index']
  #allocation1 [shape = 'u32[144,128]{1,0:T(1,128)}', space=vmem, size = 0x12000, scoped, tag = 'internal scratch']
  #allocation2 [shape = 'bf16[32,8]{1,0:T(8,128)(2,1)}', space=vmem, size = 0x2000, scoped, tag = 'scratch operand']
  #allocation3 [shape = 'bf16[8,32]{1,0:T(8,128)(2,1)}', space=vmem, size = 0x800, scoped, tag = 'scratch operand']
  #allocation4 [shape = 'f32[8,32]{1,0:T(8,128)}', space=vmem, size = 0x1000, scoped, tag = 'scratch operand']
  %s0 = inlined_call_operand.hbm [shape: bf16[2,8,32], index: 0, kind: input, shape index: {}]
  %s1 = inlined_call_operand.hbm [shape: bf16[32,32], index: 1, kind: input, shape index: {}]
  %s2 = inlined_call_operand.vmem [shape: f32[1,32], index: 2, kind: input, shape index: {}]
  %s3 = inlined_call_operand.hbm [shape: bf16[32,32], index: 3, kind: input, shape index: {}]
  %s4 = inlined_call_operand.vmem [shape: f32[1,32], index: 4, kind: input, shape index: {}]
  %s5 = inlined_call_operand.hbm [shape: bf16[32,32], index: 5, kind: input, shape index: {}]
  %s6 = inlined_call_operand.vmem [shape: f32[1,32], index: 6, kind: input, shape index: {}]
  %s7 = inlined_call_operand.hbm [shape: bf16[32,32], index: 7, kind: input, shape index: {}]
  %s8 = inlined_call_operand.vmem [shape: f32[1,32], index: 8, kind: input, shape index: {}]
  %s9 = inlined_call_operand.hbm [shape: f32[2,8,32], index: 9, kind: output, shape index: {}]
  %s10 = sld [smem:[#allocation0]]
  $region93: #{tpu_custom_call.1} parent=0
    _
  %s12 = ssub.s32 1, %s10
  %s13 = scalar_select 0, %s12, %s10
  $region1: #{tpu_custom_call.1} parent=0
    #allocation5 [shape = 'u8[4096]{0}', space=vmem, size = 0x1000, scoped, tag = 'input window, operand 0']
    #allocation6 [shape = 's32[2]{0}', space=sflag, size = 0x8, scoped, tag = 'scoped memory for tpu_custom_call.1']
    #allocation7 [shape = 's32[2]{0}', space=sflag, size = 0x8, scoped, tag = 'scoped memory for tpu_custom_call.1']
    #allocation8 [shape = 'u8[8192]{0}', space=vmem, size = 0x2000, scoped, tag = 'input window, operand 1, single buffered']
    #allocation9 [shape = 's32[1]{0}', space=sflag, size = 0x4, scoped, tag = 'scoped memory for tpu_custom_call.1']
    #allocation10 [shape = 'u8[8192]{0}', space=vmem, size = 0x2000, scoped, tag = 'input window, operand 3, single buffered']
    #allocation11 [shape = 'u8[8192]{0}', space=vmem, size = 0x2000, scoped, tag = 'input window, operand 5, single buffered']
    #allocation12 [shape = 's32[1]{0}', space=sflag, size = 0x4, scoped, tag = 'scoped memory for tpu_custom_call.1']
    #allocation13 [shape = 'u8[8192]{0}', space=vmem, size = 0x2000, scoped, tag = 'input window, operand 7, single buffered']
    #allocation14 [shape = 'u8[8192]{0}', space=vmem, size = 0x2000, scoped, tag = 'output window, operand 0']
    %14 = vsyncpa [#allocation6], 0
    %s15 = scalar_lea.sflag [#allocation6], 1
    %16 = vsyncpa %s15, 0
    %17 = vsyncpa [#allocation9], 0
    %18 = vsyncpa [#allocation12], 0
    %19 = vsyncpa [#allocation7], 0
    %s20 = scalar_lea.sflag [#allocation7], 1
    %21 = vsyncpa %s20, 0
    loop: start=0, step=1, limit=4
    $region2: #{tpu_custom_call.1} parent=1 // loop_pre_header
      _
    $region3: #{tpu_custom_call.1} parent=1 // loop_header
      %s23 = sphi 0, %s27
      %p24 = scmp.ge.s32.totalorder %s23, 4
      %s30 = sphi 0, %s42
      %s31 = sphi 0, %s38
      %s32 = sphi 0, %s30
      %s33 = sphi 0, %s31
      %s34 = sphi 0, %s32
      %s35 = sphi 0, %s33
      %s45 = sphi 0, %s47
      %s48 = sphi 0, %s45
      %s49 = sphi 0, %s48
      %s65 = sphi 0, %s49
      %s69 = sphi 0, %s69
      %s71 = sphi 0, %s69
      %s72 = sphi 0, %s71
      %s86 = sphi 0, %s72
      %s90 = sphi 0, %s90
      %s92 = sphi 0, %s90
      %s93 = sphi 0, %s92
      %s107 = sphi 0, %s93
      %s111 = sphi 0, %s111
      %s113 = sphi 0, %s111
      %s114 = sphi 0, %s113
      %s128 = sphi 0, %s114
      %s132 = sphi 0, %s132
      %s134 = sphi 0, %s132
      %s135 = sphi 0, %s134
      %s149 = sphi 0, %s135
      %s153 = sphi 0, %s153
      %s155 = sphi 0, %s153
      %s156 = sphi 0, %s155
      %s170 = sphi 0, %s156
      %s174 = sphi 0, %s174
      %s176 = sphi 0, %s174
      %s177 = sphi 0, %s176
      %s191 = sphi 0, %s177
      %s195 = sphi 0, %s195
      %s197 = sphi 0, %s195
      %s198 = sphi 0, %s197
      %s212 = sphi 0, %s198
      %s216 = sphi 0, %s216
      %s218 = sphi 0, %s216
      %s219 = sphi 0, %s218
      %s233 = sphi 0, %s219
      %s241 = sphi 0, %s243
      %s244 = sphi 0, %s241
      %s245 = sphi 0, %s244
      %s261 = sphi 0, %s245
    $region4: #{tpu_custom_call.1} parent=1 // loop_header_branch
      %26 = sbr.rel (%p24) target = $region8
    $region5: #{tpu_custom_call.1} parent=1 // loop_body
      %s28 = ssub.s32 %s23, 1
      %s29 = ssub.s32 %s23, 2
      %s36 = sadd.s32 1, %s31
      %p37 = scmp.ge.s32.totalorder %s36, 1
      %s38 = scalar_select %p37, 0, %s36
      %s39 = sadd.s32 1, %s30
      %s40 = scalar_select %p37, %s39, %s30
      %p41 = scmp.ge.s32.totalorder %s40, 2
      %s42 = scalar_select %p41, 0, %s40
      %s43 = ssub.s32 %s30, %s42
      %p44 = scmp.eq.s32.totalorder %s43, 0
      %s46 = sadd.s32 %s45, 1
      %s47 = scalar_select %p44, %s45, %s46
      %p50 = pneg %p44
      %p51 = scmp.eq.s32.totalorder %s23, 1
      %p52 = por %p50, %p51
      %p53 = scmp.ne.s32.totalorder %s45, %s48
      %p54 = scmp.eq.s32.totalorder %s23, 0
      %p55 = por %p53, %p54
      %p56 = scmp.ne.s32.totalorder %s45, %s48
      %p57 = scmp.eq.s32.totalorder %s28, 1
      %p58 = por %p56, %p57
      %p59 = scmp.ne.s32.totalorder %s48, %s49
      %p60 = scmp.eq.s32.totalorder %s28, 0
      %p61 = por %p59, %p60
      %p62 = scmp.ne.s32.totalorder %s48, %s49
      %p63 = scmp.eq.s32.totalorder %s29, 1
      %p64 = por %p62, %p63
      %p66 = scmp.ne.s32.totalorder %s49, %s65
      %p67 = scmp.eq.s32.totalorder %s29, 0
      %p68 = por %p66, %p67
      %s70 = sadd.s32 %s69, 1
      %p73 = scmp.eq.s32.totalorder %s23, 1
      %p74 = scmp.ne.s32.totalorder %s69, %s71
      %p75 = scmp.eq.s32.totalorder %s23, 0
      %p76 = por %p74, %p75
      %p77 = scmp.ne.s32.totalorder %s69, %s71
      %p78 = scmp.eq.s32.totalorder %s28, 1
      %p79 = por %p77, %p78
      %p80 = scmp.ne.s32.totalorder %s71, %s72
      %p81 = scmp.eq.s32.totalorder %s28, 0
      %p82 = por %p80, %p81
      %p83 = scmp.ne.s32.totalorder %s71, %s72
      %p84 = scmp.eq.s32.totalorder %s29, 1
      %p85 = por %p83, %p84
      %p87 = scmp.ne.s32.totalorder %s72, %s86
      %p88 = scmp.eq.s32.totalorder %s29, 0
      %p89 = por %p87, %p88
      %s91 = sadd.s32 %s90, 1
      %p94 = scmp.eq.s32.totalorder %s23, 1
      %p95 = scmp.ne.s32.totalorder %s90, %s92
      %p96 = scmp.eq.s32.totalorder %s23, 0
      %p97 = por %p95, %p96
      %p98 = scmp.ne.s32.totalorder %s90, %s92
      %p99 = scmp.eq.s32.totalorder %s28, 1
      %p100 = por %p98, %p99
      %p101 = scmp.ne.s32.totalorder %s92, %s93
      %p102 = scmp.eq.s32.totalorder %s28, 0
      %p103 = por %p101, %p102
      %p104 = scmp.ne.s32.totalorder %s92, %s93
      %p105 = scmp.eq.s32.totalorder %s29, 1
      %p106 = por %p104, %p105
      %p108 = scmp.ne.s32.totalorder %s93, %s107
      %p109 = scmp.eq.s32.totalorder %s29, 0
      %p110 = por %p108, %p109
      %s112 = sadd.s32 %s111, 1
      %p115 = scmp.eq.s32.totalorder %s23, 1
      %p116 = scmp.ne.s32.totalorder %s111, %s113
      %p117 = scmp.eq.s32.totalorder %s23, 0
      %p118 = por %p116, %p117
      %p119 = scmp.ne.s32.totalorder %s111, %s113
      %p120 = scmp.eq.s32.totalorder %s28, 1
      %p121 = por %p119, %p120
      %p122 = scmp.ne.s32.totalorder %s113, %s114
      %p123 = scmp.eq.s32.totalorder %s28, 0
      %p124 = por %p122, %p123
      %p125 = scmp.ne.s32.totalorder %s113, %s114
      %p126 = scmp.eq.s32.totalorder %s29, 1
      %p127 = por %p125, %p126
      %p129 = scmp.ne.s32.totalorder %s114, %s128
      %p130 = scmp.eq.s32.totalorder %s29, 0
      %p131 = por %p129, %p130
      %s133 = sadd.s32 %s132, 1
      %p136 = scmp.eq.s32.totalorder %s23, 1
      %p137 = scmp.ne.s32.totalorder %s132, %s134
      %p138 = scmp.eq.s32.totalorder %s23, 0
      %p139 = por %p137, %p138
      %p140 = scmp.ne.s32.totalorder %s132, %s134
      %p141 = scmp.eq.s32.totalorder %s28, 1
      %p142 = por %p140, %p141
      %p143 = scmp.ne.s32.totalorder %s134, %s135
      %p144 = scmp.eq.s32.totalorder %s28, 0
      %p145 = por %p143, %p144
      %p146 = scmp.ne.s32.totalorder %s134, %s135
      %p147 = scmp.eq.s32.totalorder %s29, 1
      %p148 = por %p146, %p147
      %p150 = scmp.ne.s32.totalorder %s135, %s149
      %p151 = scmp.eq.s32.totalorder %s29, 0
      %p152 = por %p150, %p151
      %s154 = sadd.s32 %s153, 1
      %p157 = scmp.eq.s32.totalorder %s23, 1
      %p158 = scmp.ne.s32.totalorder %s153, %s155
      %p159 = scmp.eq.s32.totalorder %s23, 0
      %p160 = por %p158, %p159
      %p161 = scmp.ne.s32.totalorder %s153, %s155
      %p162 = scmp.eq.s32.totalorder %s28, 1
      %p163 = por %p161, %p162
      %p164 = scmp.ne.s32.totalorder %s155, %s156
      %p165 = scmp.eq.s32.totalorder %s28, 0
      %p166 = por %p164, %p165
      %p167 = scmp.ne.s32.totalorder %s155, %s156
      %p168 = scmp.eq.s32.totalorder %s29, 1
      %p169 = por %p167, %p168
      %p171 = scmp.ne.s32.totalorder %s156, %s170
      %p172 = scmp.eq.s32.totalorder %s29, 0
      %p173 = por %p171, %p172
      %s175 = sadd.s32 %s174, 1
      %p178 = scmp.eq.s32.totalorder %s23, 1
      %p179 = scmp.ne.s32.totalorder %s174, %s176
      %p180 = scmp.eq.s32.totalorder %s23, 0
      %p181 = por %p179, %p180
      %p182 = scmp.ne.s32.totalorder %s174, %s176
      %p183 = scmp.eq.s32.totalorder %s28, 1
      %p184 = por %p182, %p183
      %p185 = scmp.ne.s32.totalorder %s176, %s177
      %p186 = scmp.eq.s32.totalorder %s28, 0
      %p187 = por %p185, %p186
      %p188 = scmp.ne.s32.totalorder %s176, %s177
      %p189 = scmp.eq.s32.totalorder %s29, 1
      %p190 = por %p188, %p189
      %p192 = scmp.ne.s32.totalorder %s177, %s191
      %p193 = scmp.eq.s32.totalorder %s29, 0
      %p194 = por %p192, %p193
      %s196 = sadd.s32 %s195, 1
      %p199 = scmp.eq.s32.totalorder %s23, 1
      %p200 = scmp.ne.s32.totalorder %s195, %s197
      %p201 = scmp.eq.s32.totalorder %s23, 0
      %p202 = por %p200, %p201
      %p203 = scmp.ne.s32.totalorder %s195, %s197
      %p204 = scmp.eq.s32.totalorder %s28, 1
      %p205 = por %p203, %p204
      %p206 = scmp.ne.s32.totalorder %s197, %s198
      %p207 = scmp.eq.s32.totalorder %s28, 0
      %p208 = por %p206, %p207
      %p209 = scmp.ne.s32.totalorder %s197, %s198
      %p210 = scmp.eq.s32.totalorder %s29, 1
      %p211 = por %p209, %p210
      %p213 = scmp.ne.s32.totalorder %s198, %s212
      %p214 = scmp.eq.s32.totalorder %s29, 0
      %p215 = por %p213, %p214
      %s217 = sadd.s32 %s216, 1
      %p220 = scmp.eq.s32.totalorder %s23, 1
      %p221 = scmp.ne.s32.totalorder %s216, %s218
      %p222 = scmp.eq.s32.totalorder %s23, 0
      %p223 = por %p221, %p222
      %p224 = scmp.ne.s32.totalorder %s216, %s218
      %p225 = scmp.eq.s32.totalorder %s28, 1
      %p226 = por %p224, %p225
      %p227 = scmp.ne.s32.totalorder %s218, %s219
      %p228 = scmp.eq.s32.totalorder %s28, 0
      %p229 = por %p227, %p228
      %p230 = scmp.ne.s32.totalorder %s218, %s219
      %p231 = scmp.eq.s32.totalorder %s29, 1
      %p232 = por %p230, %p231
      %p234 = scmp.ne.s32.totalorder %s219, %s233
      %p235 = scmp.eq.s32.totalorder %s29, 0
      %p236 = por %p234, %p235
      %s237 = ssub.s32 %s30, %s42
      %s238 = ssub.s32 %s31, %s38
      %s239 = sor.u32 %s237, %s238
      %p240 = scmp.eq.s32.totalorder %s239, 0
      %s242 = sadd.s32 %s241, 1
      %s243 = scalar_select %p240, %s241, %s242
      %p246 = pneg %p240
      %p247 = scmp.eq.s32.totalorder %s23, 1
      %p248 = por %p246, %p247
      %p249 = scmp.ne.s32.totalorder %s241, %s244
      %p250 = scmp.eq.s32.totalorder %s23, 0
      %p251 = por %p249, %p250
      %p252 = scmp.ne.s32.totalorder %s241, %s244
      %p253 = scmp.eq.s32.totalorder %s28, 1
      %p254 = por %p252, %p253
      %p255 = scmp.ne.s32.totalorder %s244, %s245
      %p256 = scmp.eq.s32.totalorder %s28, 0
      %p257 = por %p255, %p256
      %p258 = scmp.ne.s32.totalorder %s244, %s245
      %p259 = scmp.eq.s32.totalorder %s29, 1
      %p260 = por %p258, %p259
      %p262 = scmp.ne.s32.totalorder %s245, %s261
      %p263 = scmp.eq.s32.totalorder %s29, 0
      %p264 = por %p262, %p263
      %p265 = scmp.le.s32.totalorder 1, %s23
      %p266 = scmp.lt.s32.totalorder %s23, 3
      %p267 = pnand %p265, %p266
      %p268 = pneg %p267
      // Predicated region
      $region9: #{tpu_custom_call.1} parent=5 // pred_check
        _
      $region10: #{tpu_custom_call.1} parent=5 // pred_check_branch
        %270 = sbr.rel (%p267) target = $region12
      $region11: #{tpu_custom_call.1} parent=5 // pred_region
        %s271 = ssub.s32 %s23, 1
        // Predicated region
        $region13: #{tpu_custom_call.1} parent=11 // pred_check
          %p272 = pneg %p82
        $region14: #{tpu_custom_call.1} parent=11 // pred_check_branch
          %274 = sbr.rel (%p272) target = $region16
        $region15: #{tpu_custom_call.1} parent=11 // pred_region
          %s276 = ssub.s32 256, 256
          %277 = vsyncadd [#allocation9], %s276
          %s278 = sshll.u32 [#allocation8], 4
          %s279 = int_to_ptr.vmem [resolvable:$true] %s278
          %284 = dma.hbm_to_vmem [thread:$0]  %s1, 256, %s279, [#allocation9], 64, 64, 4
        $region16: #{tpu_custom_call.1} parent=11 // pred_fallthru
          _
        // Predicated region
        $region17: #{tpu_custom_call.1} parent=11 // pred_check
          %p285 = pneg %p103
        $region18: #{tpu_custom_call.1} parent=11 // pred_check_branch
          %287 = sbr.rel (%p285) target = $region20
        $region19: #{tpu_custom_call.1} parent=11 // pred_region
          _
        $region20: #{tpu_custom_call.1} parent=11 // pred_fallthru
          _
        // Predicated region
        $region21: #{tpu_custom_call.1} parent=11 // pred_check
          %p288 = pneg %p124
        $region22: #{tpu_custom_call.1} parent=11 // pred_check_branch
          %290 = sbr.rel (%p288) target = $region24
        $region23: #{tpu_custom_call.1} parent=11 // pred_region
          %s292 = ssub.s32 256, 256
          %293 = vsyncadd [#allocation9], %s292
          %s294 = sshll.u32 [#allocation10], 4
          %s295 = int_to_ptr.vmem [resolvable:$true] %s294
          %300 = dma.hbm_to_vmem [thread:$0]  %s3, 256, %s295, [#allocation9], 64, 64, 4
        $region24: #{tpu_custom_call.1} parent=11 // pred_fallthru
          _
        // Predicated region
        $region25: #{tpu_custom_call.1} parent=11 // pred_check
          %p301 = pneg %p145
        $region26: #{tpu_custom_call.1} parent=11 // pred_check_branch
          %303 = sbr.rel (%p301) target = $region28
        $region27: #{tpu_custom_call.1} parent=11 // pred_region
          _
        $region28: #{tpu_custom_call.1} parent=11 // pred_fallthru
          _
        // Predicated region
        $region29: #{tpu_custom_call.1} parent=11 // pred_check
          %p304 = pneg %p166
        $region30: #{tpu_custom_call.1} parent=11 // pred_check_branch
          %306 = sbr.rel (%p304) target = $region32
        $region31: #{tpu_custom_call.1} parent=11 // pred_region
          %s308 = ssub.s32 256, 256
          %309 = vsyncadd [#allocation12], %s308
          %s310 = sshll.u32 [#allocation11], 4
          %s311 = int_to_ptr.vmem [resolvable:$true] %s310
          %316 = dma.hbm_to_vmem [thread:$0]  %s5, 256, %s311, [#allocation12], 64, 64, 4
        $region32: #{tpu_custom_call.1} parent=11 // pred_fallthru
          _
        // Predicated region
        $region33: #{tpu_custom_call.1} parent=11 // pred_check
          %p317 = pneg %p187
        $region34: #{tpu_custom_call.1} parent=11 // pred_check_branch
          %319 = sbr.rel (%p317) target = $region36
        $region35: #{tpu_custom_call.1} parent=11 // pred_region
          _
        $region36: #{tpu_custom_call.1} parent=11 // pred_fallthru
          _
        // Predicated region
        $region37: #{tpu_custom_call.1} parent=11 // pred_check
          %p320 = pneg %p208
        $region38: #{tpu_custom_call.1} parent=11 // pred_check_branch
          %322 = sbr.rel (%p320) target = $region40
        $region39: #{tpu_custom_call.1} parent=11 // pred_region
          %s324 = ssub.s32 256, 256
          %325 = vsyncadd [#allocation12], %s324
          %s326 = sshll.u32 [#allocation13], 4
          %s327 = int_to_ptr.vmem [resolvable:$true] %s326
          %332 = dma.hbm_to_vmem [thread:$0]  %s7, 256, %s327, [#allocation12], 64, 64, 4
        $region40: #{tpu_custom_call.1} parent=11 // pred_fallthru
          _
        // Predicated region
        $region41: #{tpu_custom_call.1} parent=11 // pred_check
          %p333 = pneg %p229
        $region42: #{tpu_custom_call.1} parent=11 // pred_check_branch
          %335 = sbr.rel (%p333) target = $region44
        $region43: #{tpu_custom_call.1} parent=11 // pred_region
          _
        $region44: #{tpu_custom_call.1} parent=11 // pred_fallthru
          _
      $region12: #{tpu_custom_call.1} parent=5 // pred_fallthru
        _
      %p336 = scmp.lt.s32.totalorder %s23, 2
      // Predicated region
      $region45: #{tpu_custom_call.1} parent=5 // pred_check
        %p337 = pneg %p336
      $region46: #{tpu_custom_call.1} parent=5 // pred_check_branch
        %339 = sbr.rel (%p337) target = $region48
      $region47: #{tpu_custom_call.1} parent=5 // pred_region
        // Predicated region
        $region49: #{tpu_custom_call.1} parent=47 // pred_check
          %p340 = pneg %p55
        $region50: #{tpu_custom_call.1} parent=47 // pred_check_branch
          %342 = sbr.rel (%p340) target = $region52
        $region51: #{tpu_custom_call.1} parent=47 // pred_region
          %s343 = sand.u32 %s45, 1
          %s344 = scalar_lea.sflag [#allocation6], %s343
          %s345 = sand.u32 %s45, 1
          %s346 = smul.addr %s345, 4
          %s347 = scalar_lea.vmem [#allocation5], %s346
          %s349 = ssub.s32 64, 64
          %350 = vsyncadd %s344, %s349
          %s351 = smul.addr %s30, 64
          %s352 = scalar_lea.hbm %s0, %s351
          %s354 = sshll.u32 %s347, 4
          %s355 = int_to_ptr.vmem [resolvable:$true] %s354
          %357 = dma.hbm_to_vmem [thread:$0]  %s352, 64, %s355, %s344
        $region52: #{tpu_custom_call.1} parent=47 // pred_fallthru
          _
      $region48: #{tpu_custom_call.1} parent=5 // pred_fallthru
        _
      %p358 = scmp.le.s32.totalorder 1, %s23
      %p359 = scmp.lt.s32.totalorder %s23, 3
      %p360 = pnand %p358, %p359
      %p361 = pneg %p360
      // Predicated region
      $region53: #{tpu_custom_call.1} parent=5 // pred_check
        _
      $region54: #{tpu_custom_call.1} parent=5 // pred_check_branch
        %363 = sbr.rel (%p360) target = $region56
      $region55: #{tpu_custom_call.1} parent=5 // pred_region
        %s364 = ssub.s32 %s23, 1
        %s365 = sand.u32 %s48, 1
        %s366 = scalar_lea.sflag [#allocation6], %s365
        %s367 = sand.u32 %s48, 1
        %s368 = smul.addr %s367, 4
        %s369 = scalar_lea.vmem [#allocation5], %s368
        // Predicated region
        $region57: #{tpu_custom_call.1} parent=55 // pred_check
          %p370 = pneg %p61
        $region58: #{tpu_custom_call.1} parent=55 // pred_check_branch
          %372 = sbr.rel (%p370) target = $region60
        $region59: #{tpu_custom_call.1} parent=55 // pred_region
          %373 = dma.done %s366, 64
        $region60: #{tpu_custom_call.1} parent=55 // pred_fallthru
          _
        // Predicated region
        $region61: #{tpu_custom_call.1} parent=55 // pred_check
          %p374 = pneg %p82
        $region62: #{tpu_custom_call.1} parent=55 // pred_check_branch
          %376 = sbr.rel (%p374) target = $region64
        $region63: #{tpu_custom_call.1} parent=55 // pred_region
          %377 = dma.done [#allocation9], 256
        $region64: #{tpu_custom_call.1} parent=55 // pred_fallthru
          _
        // Predicated region
        $region65: #{tpu_custom_call.1} parent=55 // pred_check
          %p378 = pneg %p124
        $region66: #{tpu_custom_call.1} parent=55 // pred_check_branch
          %380 = sbr.rel (%p378) target = $region68
        $region67: #{tpu_custom_call.1} parent=55 // pred_region
          %381 = dma.done [#allocation9], 256
        $region68: #{tpu_custom_call.1} parent=55 // pred_fallthru
          _
        // Predicated region
        $region69: #{tpu_custom_call.1} parent=55 // pred_check
          %p382 = pneg %p166
        $region70: #{tpu_custom_call.1} parent=55 // pred_check_branch
          %384 = sbr.rel (%p382) target = $region72
        $region71: #{tpu_custom_call.1} parent=55 // pred_region
          %385 = dma.done [#allocation12], 256
        $region72: #{tpu_custom_call.1} parent=55 // pred_fallthru
          _
        // Predicated region
        $region73: #{tpu_custom_call.1} parent=55 // pred_check
          %p386 = pneg %p208
        $region74: #{tpu_custom_call.1} parent=55 // pred_check_branch
          %388 = sbr.rel (%p386) target = $region76
        $region75: #{tpu_custom_call.1} parent=55 // pred_region
          %389 = dma.done [#allocation12], 256
        $region76: #{tpu_custom_call.1} parent=55 // pred_fallthru
          _
        %s390 = sand.u32 %s48, 1
        %s391 = scalar_lea.sflag [#allocation6], %s390
        %s392 = sand.u32 %s48, 1
        %s393 = smul.addr %s392, 4
        %s394 = scalar_lea.vmem [#allocation5], %s393
        %p395 = pneg %p61
        %p396 = pneg %p58
        %p397 = pneg %p82
        %p398 = pneg %p79
        %p399 = pneg %p103
        %p400 = pneg %p100
        %p401 = pneg %p124
        %p402 = pneg %p121
        %p403 = pneg %p145
        %p404 = pneg %p142
        %p405 = pneg %p166
        %p406 = pneg %p163
        %p407 = pneg %p187
        %p408 = pneg %p184
        %p409 = pneg %p208
        %p410 = pneg %p205
        %p411 = pneg %p229
        %p412 = pneg %p226
        %p413 = pneg %p257
        %p414 = pneg %p254
        %s415 = sand.u32 %s244, 1
        %s416 = scalar_lea.sflag [#allocation7], %s415
        %s417 = sand.u32 %s244, 1
        %s418 = smul.addr %s417, 8
        %s419 = scalar_lea.vmem [#allocation14], %s418
        %p421 = scmp.eq.s32.totalorder %s33, 0
        // Predicated region
        $region77: #{tpu_custom_call.1} parent=55 // pred_check
          %p422 = pneg %p421
        $region78: #{tpu_custom_call.1} parent=55 // pred_check_branch
          %424 = sbr.rel (%p422) target = $region80
        $region79: #{tpu_custom_call.1} parent=55 // pred_region
          %v425 = vld [vmem:[%s369] sm:$0xf]
          %v426 = vld [vmem:[#allocation10] sm:$0xf]
          %v427 = vld [vmem:[#allocation10 + $0x4] sm:$0xf]
          %v428 = vld [vmem:[#allocation10 + $0x8] sm:$0xf]
          %v429 = vld [vmem:[#allocation10 + $0xc] sm:$0xf]
          %v430 = vld [vmem:[%s4] sm:$0x1]
          %v432 = vlaneseq
          %v433 = vshrl.u32 %v432, 7
          %v434 = vsub.s32 0, %v433
          %v435 = vrot.slane %v430, %v434
          %v441 = vunpack.c.l.b16 %v426
          %v442 = vunpack.c.l.b16 %v427
          %v443 = vunpack.c.l.b16 %v428
          %v444 = vunpack.c.l.b16 %v429
          %v445 = vpack.c.b16 %v442, %v441
          %v446 = vpack.c.b16 %v444, %v443
          %vm449 = vcmask 261120
          %v451 = vsel %vm449, %v425, 0
          %453 = vmatprep.subr.bf16.mxu0 0
          %454 = vmatpush1.bf16.msra.mxu0 0
          %455 = vmatprep.subr.bf16.mxu0 0
          %456 = vmatpush1.bf16.msra.mxu0 0
          %457 = vmatprep.subr.bf16.mxu0 0
          %458 = vmatpush1.bf16.msra.mxu0 0
          %459 = vmatprep.subr.bf16.mxu0 0
          %460 = vmatpush1.bf16.msra.mxu0 0
          %461 = vmatprep.subr.bf16.mxu0 0
          %462 = vmatpush1.bf16.msra.mxu0 0
          %463 = vmatprep.subr.bf16.mxu0 0
          %464 = vmatpush1.bf16.msra.mxu0 0
          %465 = vmatprep.subr.bf16.mxu0 0
          %466 = vmatpush1.bf16.msra.mxu0 %v446
          %467 = vmatprep.subr.bf16.mxu0 0
          %468 = vmatpush1.bf16.msra.mxu0 %v445
          %469 = vmatprep.subr.bf16.mxu0 0
          %470 = vmatpush2.bf16.msra.mxu0 0
          %471 = vmatprep.subr.bf16.mxu0 0
          %472 = vmatpush2.bf16.msra.mxu0 0
          %473 = vmatprep.subr.bf16.mxu0 0
          %474 = vmatpush2.bf16.msra.mxu0 0
          %475 = vmatprep.subr.bf16.mxu0 0
          %476 = vmatpush2.bf16.msra.mxu0 0
          %477 = vmatprep.subr.bf16.mxu0 0
          %478 = vmatpush2.bf16.msra.mxu0 0
          %479 = vmatprep.subr.bf16.mxu0 0
          %480 = vmatpush2.bf16.msra.mxu0 0
          %481 = vmatprep.subr.bf16.mxu0 0
          %482 = vmatpush2.bf16.msra.mxu0 0
          %483 = vmatprep.subr.bf16.mxu0 0
          %484 = vmatpush2.bf16.msra.mxu0 0
          %485 = vmatprep.mubr.bf16.mxu0 0
          %486 = vmatmul.mubr.bf16.gmra.mxu0 %v451
          %v487 = vpop.f32.mrf.mxu0
          %v488 = vadd.f32 %v435, %v487
          %v489 = vpop.f32.mrf.mxu0
          %v490 = vpop.f32.mrf.mxu0
          %v491 = vpop.f32.mrf.mxu0
          %492 = vdwg.mxu0
          %v493 = vld [vmem:[#allocation11] sm:$0xf]
          %v494 = vld [vmem:[#allocation11 + $0x4] sm:$0xf]
          %v495 = vld [vmem:[#allocation11 + $0x8] sm:$0xf]
          %v496 = vld [vmem:[#allocation11 + $0xc] sm:$0xf]
          %v497 = vld [vmem:[%s6] sm:$0x1]
          %v499 = vlaneseq
          %v500 = vshrl.u32 %v499, 7
          %v501 = vsub.s32 0, %v500
          %v502 = vrot.slane %v497, %v501
          %v508 = vunpack.c.l.b16 %v493
          %v509 = vunpack.c.l.b16 %v494
          %v510 = vunpack.c.l.b16 %v495
          %v511 = vunpack.c.l.b16 %v496
          %v512 = vpack.c.b16 %v509, %v508
          %v513 = vpack.c.b16 %v511, %v510
          %516 = vmatprep.subr.bf16.mxu0 0
          %517 = vmatpush1.bf16.msra.mxu0 0
          %518 = vmatprep.subr.bf16.mxu0 0
          %519 = vmatpush1.bf16.msra.mxu0 0
          %520 = vmatprep.subr.bf16.mxu0 0
          %521 = vmatpush1.bf16.msra.mxu0 0
          %522 = vmatprep.subr.bf16.mxu0 0
          %523 = vmatpush1.bf16.msra.mxu0 0
          %524 = vmatprep.subr.bf16.mxu0 0
          %525 = vmatpush1.bf16.msra.mxu0 0
          %526 = vmatprep.subr.bf16.mxu0 0
          %527 = vmatpush1.bf16.msra.mxu0 0
          %528 = vmatprep.subr.bf16.mxu0 0
          %529 = vmatpush1.bf16.msra.mxu0 %v513
          %530 = vmatprep.subr.bf16.mxu0 0
          %531 = vmatpush1.bf16.msra.mxu0 %v512
          %532 = vmatprep.subr.bf16.mxu0 0
          %533 = vmatpush2.bf16.msra.mxu0 0
          %534 = vmatprep.subr.bf16.mxu0 0
          %535 = vmatpush2.bf16.msra.mxu0 0
          %536 = vmatprep.subr.bf16.mxu0 0
          %537 = vmatpush2.bf16.msra.mxu0 0
          %538 = vmatprep.subr.bf16.mxu0 0
          %539 = vmatpush2.bf16.msra.mxu0 0
          %540 = vmatprep.subr.bf16.mxu0 0
          %541 = vmatpush2.bf16.msra.mxu0 0
          %542 = vmatprep.subr.bf16.mxu0 0
          %543 = vmatpush2.bf16.msra.mxu0 0
          %544 = vmatprep.subr.bf16.mxu0 0
          %545 = vmatpush2.bf16.msra.mxu0 0
          %546 = vmatprep.subr.bf16.mxu0 0
          %547 = vmatpush2.bf16.msra.mxu0 0
          %548 = vmatprep.mubr.bf16.mxu0 0
          %549 = vmatmul.mubr.bf16.gmra.mxu0 %v451
          %v550 = vpop.f32.mrf.mxu0
          %v551 = vadd.f32 %v502, %v550
          %v552 = vpop.f32.mrf.mxu0
          %v553 = vpop.f32.mrf.mxu0
          %v554 = vpop.f32.mrf.mxu0
          %555 = vdwg.mxu0
          %556 = vxpose.xlu0.b32.start [1/16] %v488, 128
          %557 = vxpose.xlu0.b32.cont [2/16] 0.0, 128
          %558 = vxpose.xlu0.b32.cont [3/16] 0.0, 128
          %559 = vxpose.xlu0.b32.cont [4/16] 0.0, 128
          %560 = vxpose.xlu0.b32.cont [5/16] 0.0, 128
          %561 = vxpose.xlu0.b32.cont [6/16] 0.0, 128
          %562 = vxpose.xlu0.b32.cont [7/16] 0.0, 128
          %563 = vxpose.xlu0.b32.cont [8/16] 0.0, 128
          %564 = vxpose.xlu0.b32.cont [9/16] 0.0, 128
          %565 = vxpose.xlu0.b32.cont [10/16] 0.0, 128
          %566 = vxpose.xlu0.b32.cont [11/16] 0.0, 128
          %567 = vxpose.xlu0.b32.cont [12/16] 0.0, 128
          %568 = vxpose.xlu0.b32.cont [13/16] 0.0, 128
          %569 = vxpose.xlu0.b32.cont [14/16] 0.0, 128
          %570 = vxpose.xlu0.b32.cont [15/16] 0.0, 128
          %571 = vxpose.xlu0.b32.end [16/16] 0.0, 128
          %v572 = vpop.trf.xlu0
          %v573 = vpop.trf.xlu0
          %v574 = vpop.trf.xlu0
          %v575 = vpop.trf.xlu0
          %v576 = vpop.trf.xlu0
          %v577 = vpop.trf.xlu0
          %v578 = vpop.trf.xlu0
          %v579 = vpop.trf.xlu0
          %v580 = vpop.trf.xlu0
          %v581 = vpop.trf.xlu0
          %v582 = vpop.trf.xlu0
          %v583 = vpop.trf.xlu0
          %v584 = vpop.trf.xlu0
          %v585 = vpop.trf.xlu0
          %v586 = vpop.trf.xlu0
          %v587 = vpop.trf.xlu0
          %v588 = vpack.c.bf16 %v573, %v572
          %v589 = vpack.c.bf16 %v575, %v574
          %v592 = vunpack.c.l.b16 %v588
          %v593 = vunpack.c.h.b16 %v588
          %v594 = vunpack.c.l.b16 %v589
          %v595 = vunpack.c.h.b16 %v589
          %v596 = vpack.c.b16 %v592, %v592
          %v597 = vpack.c.b16 %v593, %v593
          %v598 = vpack.c.b16 %v594, %v594
          %v599 = vpack.c.b16 %v595, %v595
          %vm604 = vcmask 60416
          %605 = vst.msk [vmem:[#allocation2] sm:$0xf] %vm604, %v596
          %606 = vst.msk [vmem:[#allocation2 + $0x4] sm:$0xf] %vm604, %v597
          %607 = vst.msk [vmem:[#allocation2 + $0x8] sm:$0xf] %vm604, %v598
          %608 = vst.msk [vmem:[#allocation2 + $0xc] sm:$0xf] %vm604, %v599
          %v609 = vpack.c.bf16 %v551, %v551
          %vm610 = vcmask 257024
          %611 = vst.msk [vmem:[#allocation3] sm:$0xf] %vm610, %v609
        $region80: #{tpu_custom_call.1} parent=55 // pred_fallthru
          _
        %s612 = smul.u32 %s33, 8
        %s613 = sshra.s32 %s612, 3
        %s614 = sand.u32 %s612, 7
        %s615 = smul.addr %s613, 4
        %s616 = scalar_lea.vmem %s369, %s615 [#allocation5]
        %v617 = vld [vmem:[%s616] sm:$0xf]
        %v618 = vld [vmem:[#allocation8] sm:$0xf]
        %v619 = vld [vmem:[#allocation8 + $0x4] sm:$0xf]
        %v620 = vld [vmem:[#allocation8 + $0x8] sm:$0xf]
        %v621 = vld [vmem:[#allocation8 + $0xc] sm:$0xf]
        %v622 = vld [vmem:[%s2] sm:$0x1]
        %v624 = vlaneseq
        %v625 = vshrl.u32 %v624, 7
        %v626 = vsub.s32 0, %v625
        %v627 = vrot.slane %v622, %v626
        %v633 = vunpack.c.l.b16 %v618
        %v634 = vunpack.c.l.b16 %v619
        %v635 = vunpack.c.l.b16 %v620
        %v636 = vunpack.c.l.b16 %v621
        %v637 = vpack.c.b16 %v634, %v633
        %v638 = vpack.c.b16 %v636, %v635
        %vm641 = vcmask 261120
        %v643 = vsel %vm641, %v617, 0
        %645 = vmatprep.subr.bf16.mxu0 0
        %646 = vmatpush1.bf16.msra.mxu0 0
        %647 = vmatprep.subr.bf16.mxu0 0
        %648 = vmatpush1.bf16.msra.mxu0 0
        %649 = vmatprep.subr.bf16.mxu0 0
        %650 = vmatpush1.bf16.msra.mxu0 0
        %651 = vmatprep.subr.bf16.mxu0 0
        %652 = vmatpush1.bf16.msra.mxu0 0
        %653 = vmatprep.subr.bf16.mxu0 0
        %654 = vmatpush1.bf16.msra.mxu0 0
        %655 = vmatprep.subr.bf16.mxu0 0
        %656 = vmatpush1.bf16.msra.mxu0 0
        %657 = vmatprep.subr.bf16.mxu0 0
        %658 = vmatpush1.bf16.msra.mxu0 %v638
        %659 = vmatprep.subr.bf16.mxu0 0
        %660 = vmatpush1.bf16.msra.mxu0 %v637
        %661 = vmatprep.subr.bf16.mxu0 0
        %662 = vmatpush2.bf16.msra.mxu0 0
        %663 = vmatprep.subr.bf16.mxu0 0
        %664 = vmatpush2.bf16.msra.mxu0 0
        %665 = vmatprep.subr.bf16.mxu0 0
        %666 = vmatpush2.bf16.msra.mxu0 0
        %667 = vmatprep.subr.bf16.mxu0 0
        %668 = vmatpush2.bf16.msra.mxu0 0
        %669 = vmatprep.subr.bf16.mxu0 0
        %670 = vmatpush2.bf16.msra.mxu0 0
        %671 = vmatprep.subr.bf16.mxu0 0
        %672 = vmatpush2.bf16.msra.mxu0 0
        %673 = vmatprep.subr.bf16.mxu0 0
        %674 = vmatpush2.bf16.msra.mxu0 0
        %675 = vmatprep.subr.bf16.mxu0 0
        %676 = vmatpush2.bf16.msra.mxu0 0
        %677 = vmatprep.mubr.bf16.mxu0 0
        %678 = vmatmul.mubr.bf16.gmra.mxu0 %v643
        %v679 = vpop.f32.mrf.mxu0
        %v680 = vadd.f32 %v627, %v679
        %v681 = vpop.f32.mrf.mxu0
        %v682 = vpop.f32.mrf.mxu0
        %v683 = vpop.f32.mrf.mxu0
        %684 = vdwg.mxu0
        %v685 = vpack.c.bf16 %v680, %v680
        %v686 = vld [vmem:[#allocation2] sm:$0xf]
        %v687 = vld [vmem:[#allocation3] sm:$0xf]
        %vm688 = vcmask 64512
        %v690 = vsel %vm688, %v685, 0
        %vm692 = vcmask 1043456
        %v694 = vsel %vm692, %v686, 0
        %696 = vmatprep.subr.bf16.mxu0 0
        %697 = vmatpush1.bf16.msra.mxu0 0
        %698 = vmatprep.subr.bf16.mxu0 0
        %699 = vmatpush1.bf16.msra.mxu0 0
        %700 = vmatprep.subr.bf16.mxu0 0
        %701 = vmatpush1.bf16.msra.mxu0 0
        %702 = vmatprep.subr.bf16.mxu0 0
        %703 = vmatpush1.bf16.msra.mxu0 0
        %704 = vmatprep.subr.bf16.mxu0 0
        %705 = vmatpush1.bf16.msra.mxu0 0
        %706 = vmatprep.subr.bf16.mxu0 0
        %707 = vmatpush1.bf16.msra.mxu0 0
        %708 = vmatprep.subr.bf16.mxu0 0
        %709 = vmatpush1.bf16.msra.mxu0 0
        %710 = vmatprep.subr.bf16.mxu0 0
        %711 = vmatpush1.bf16.msra.mxu0 %v694
        %712 = vmatprep.subr.bf16.mxu0 0
        %713 = vmatpush2.bf16.msra.mxu0 0
        %714 = vmatprep.subr.bf16.mxu0 0
        %715 = vmatpush2.bf16.msra.mxu0 0
        %716 = vmatprep.subr.bf16.mxu0 0
        %717 = vmatpush2.bf16.msra.mxu0 0
        %718 = vmatprep.subr.bf16.mxu0 0
        %719 = vmatpush2.bf16.msra.mxu0 0
        %720 = vmatprep.subr.bf16.mxu0 0
        %721 = vmatpush2.bf16.msra.mxu0 0
        %722 = vmatprep.subr.bf16.mxu0 0
        %723 = vmatpush2.bf16.msra.mxu0 0
        %724 = vmatprep.subr.bf16.mxu0 0
        %725 = vmatpush2.bf16.msra.mxu0 0
        %726 = vmatprep.subr.bf16.mxu0 0
        %727 = vmatpush2.bf16.msra.mxu0 0
        %728 = vmatprep.mubr.bf16.mxu0 0
        %729 = vmatmul.mubr.bf16.gmra.mxu0 %v690
        %v730 = vpop.f32.mrf.mxu0
        %v731 = vadd.f32 0.0, %v730
        %v732 = vpop.f32.mrf.mxu0
        %v733 = vpop.f32.mrf.mxu0
        %v734 = vpop.f32.mrf.mxu0
        %735 = vdwg.mxu0
        %v736 = vsel %vm688, %v731, -inf
        %737 = vmax.xlane.f32.xlu0 %v736
        %v738 = vpop.xlane.xlu0 %737
        %v739 = vsub.f32 %v731, %v738
        %v740 = vmul.f32 %v739, 1.442695
        %v741 = vpow.pop %v740
        %v742 = vsel %vm688, %v741, 0.0
        %743 = vadd.xlane.f32.xlu0 %v742
        %v744 = vpop.xlane.xlu0 %743
        %v745 = vrcp.pop %v744
        %v746 = vmul.f32 %v741, %v745
        %v747 = vpack.c.bf16 %v746, %v746
        %v749 = vsel %vm688, %v747, 0
        %v752 = vsel %vm692, %v687, 0
        %754 = vmatprep.subr.bf16.mxu0 0
        %755 = vmatpush1.bf16.msra.mxu0 0
        %756 = vmatprep.subr.bf16.mxu0 0
        %757 = vmatpush1.bf16.msra.mxu0 0
        %758 = vmatprep.subr.bf16.mxu0 0
        %759 = vmatpush1.bf16.msra.mxu0 0
        %760 = vmatprep.subr.bf16.mxu0 0
        %761 = vmatpush1.bf16.msra.mxu0 0
        %762 = vmatprep.subr.bf16.mxu0 0
        %763 = vmatpush1.bf16.msra.mxu0 0
        %764 = vmatprep.subr.bf16.mxu0 0
        %765 = vmatpush1.bf16.msra.mxu0 0
        %766 = vmatprep.subr.bf16.mxu0 0
        %767 = vmatpush1.bf16.msra.mxu0 0
        %768 = vmatprep.subr.bf16.mxu0 0
        %769 = vmatpush1.bf16.msra.mxu0 %v752
        %770 = vmatprep.subr.bf16.mxu0 0
        %771 = vmatpush2.bf16.msra.mxu0 0
        %772 = vmatprep.subr.bf16.mxu0 0
        %773 = vmatpush2.bf16.msra.mxu0 0
        %774 = vmatprep.subr.bf16.mxu0 0
        %775 = vmatpush2.bf16.msra.mxu0 0
        %776 = vmatprep.subr.bf16.mxu0 0
        %777 = vmatpush2.bf16.msra.mxu0 0
        %778 = vmatprep.subr.bf16.mxu0 0
        %779 = vmatpush2.bf16.msra.mxu0 0
        %780 = vmatprep.subr.bf16.mxu0 0
        %781 = vmatpush2.bf16.msra.mxu0 0
        %782 = vmatprep.subr.bf16.mxu0 0
        %783 = vmatpush2.bf16.msra.mxu0 0
        %784 = vmatprep.subr.bf16.mxu0 0
        %785 = vmatpush2.bf16.msra.mxu0 0
        %786 = vmatprep.mubr.bf16.mxu0 0
        %787 = vmatmul.mubr.bf16.gmra.mxu0 %v749
        %v788 = vpop.f32.mrf.mxu0
        %v789 = vadd.f32 0.0, %v788
        %v790 = vpop.f32.mrf.mxu0
        %v791 = vpop.f32.mrf.mxu0
        %v792 = vpop.f32.mrf.mxu0
        %793 = vdwg.mxu0
        %794 = vst.msk [vmem:[#allocation4] sm:$0xff] %vm688, %v789
        %v795 = vld [vmem:[#allocation2 + $0x4] sm:$0xf]
        %v796 = vld [vmem:[#allocation3] sm:$0xf]
        %798 = vrot.lane.b32.xlu0 %v685, 120
        %v799 = vpop.permute.xlu0 %798
        %v801 = vsel %vm688, %v799, 0
        %v804 = vsel %vm692, %v795, 0
        %806 = vmatprep.subr.bf16.mxu0 0
        %807 = vmatpush1.bf16.msra.mxu0 0
        %808 = vmatprep.subr.bf16.mxu0 0
        %809 = vmatpush1.bf16.msra.mxu0 0
        %810 = vmatprep.subr.bf16.mxu0 0
        %811 = vmatpush1.bf16.msra.mxu0 0
        %812 = vmatprep.subr.bf16.mxu0 0
        %813 = vmatpush1.bf16.msra.mxu0 0
        %814 = vmatprep.subr.bf16.mxu0 0
        %815 = vmatpush1.bf16.msra.mxu0 0
        %816 = vmatprep.subr.bf16.mxu0 0
        %817 = vmatpush1.bf16.msra.mxu0 0
        %818 = vmatprep.subr.bf16.mxu0 0
        %819 = vmatpush1.bf16.msra.mxu0 0
        %820 = vmatprep.subr.bf16.mxu0 0
        %821 = vmatpush1.bf16.msra.mxu0 %v804
        %822 = vmatprep.subr.bf16.mxu0 0
        %823 = vmatpush2.bf16.msra.mxu0 0
        %824 = vmatprep.subr.bf16.mxu0 0
        %825 = vmatpush2.bf16.msra.mxu0 0
        %826 = vmatprep.subr.bf16.mxu0 0
        %827 = vmatpush2.bf16.msra.mxu0 0
        %828 = vmatprep.subr.bf16.mxu0 0
        %829 = vmatpush2.bf16.msra.mxu0 0
        %830 = vmatprep.subr.bf16.mxu0 0
        %831 = vmatpush2.bf16.msra.mxu0 0
        %832 = vmatprep.subr.bf16.mxu0 0
        %833 = vmatpush2.bf16.msra.mxu0 0
        %834 = vmatprep.subr.bf16.mxu0 0
        %835 = vmatpush2.bf16.msra.mxu0 0
        %836 = vmatprep.subr.bf16.mxu0 0
        %837 = vmatpush2.bf16.msra.mxu0 0
        %838 = vmatprep.mubr.bf16.mxu0 0
        %839 = vmatmul.mubr.bf16.gmra.mxu0 %v801
        %v840 = vpop.f32.mrf.mxu0
        %v841 = vadd.f32 0.0, %v840
        %v842 = vpop.f32.mrf.mxu0
        %v843 = vpop.f32.mrf.mxu0
        %v844 = vpop.f32.mrf.mxu0
        %845 = vdwg.mxu0
        %v846 = vsel %vm688, %v841, -inf
        %847 = vmax.xlane.f32.xlu0 %v846
        %v848 = vpop.xlane.xlu0 %847
        %v849 = vsub.f32 %v841, %v848
        %v850 = vmul.f32 %v849, 1.442695
        %v851 = vpow.pop %v850
        %v852 = vsel %vm688, %v851, 0.0
        %853 = vadd.xlane.f32.xlu0 %v852
        %v854 = vpop.xlane.xlu0 %853
        %v855 = vrcp.pop %v854
        %v856 = vmul.f32 %v851, %v855
        %v857 = vpack.c.bf16 %v856, %v856
        %v859 = vunpack.c.l.b16 %v796
        %v860 = vpack.c.b16 %v859, %v859
        %861 = vrot.lane.b32.xlu0 %v860, 120
        %v862 = vpop.permute.xlu0 %861
        %v864 = vsel %vm688, %v857, 0
        %v867 = vsel %vm692, %v862, 0
        %869 = vmatprep.subr.bf16.mxu0 0
        %870 = vmatpush1.bf16.msra.mxu0 0
        %871 = vmatprep.subr.bf16.mxu0 0
        %872 = vmatpush1.bf16.msra.mxu0 0
        %873 = vmatprep.subr.bf16.mxu0 0
        %874 = vmatpush1.bf16.msra.mxu0 0
        %875 = vmatprep.subr.bf16.mxu0 0
        %876 = vmatpush1.bf16.msra.mxu0 0
        %877 = vmatprep.subr.bf16.mxu0 0
        %878 = vmatpush1.bf16.msra.mxu0 0
        %879 = vmatprep.subr.bf16.mxu0 0
        %880 = vmatpush1.bf16.msra.mxu0 0
        %881 = vmatprep.subr.bf16.mxu0 0
        %882 = vmatpush1.bf16.msra.mxu0 0
        %883 = vmatprep.subr.bf16.mxu0 0
        %884 = vmatpush1.bf16.msra.mxu0 %v867
        %885 = vmatprep.subr.bf16.mxu0 0
        %886 = vmatpush2.bf16.msra.mxu0 0
        %887 = vmatprep.subr.bf16.mxu0 0
        %888 = vmatpush2.bf16.msra.mxu0 0
        %889 = vmatprep.subr.bf16.mxu0 0
        %890 = vmatpush2.bf16.msra.mxu0 0
        %891 = vmatprep.subr.bf16.mxu0 0
        %892 = vmatpush2.bf16.msra.mxu0 0
        %893 = vmatprep.subr.bf16.mxu0 0
        %894 = vmatpush2.bf16.msra.mxu0 0
        %895 = vmatprep.subr.bf16.mxu0 0
        %896 = vmatpush2.bf16.msra.mxu0 0
        %897 = vmatprep.subr.bf16.mxu0 0
        %898 = vmatpush2.bf16.msra.mxu0 0
        %899 = vmatprep.subr.bf16.mxu0 0
        %900 = vmatpush2.bf16.msra.mxu0 0
        %901 = vmatprep.mubr.bf16.mxu0 0
        %902 = vmatmul.mubr.bf16.gmra.mxu0 %v864
        %v903 = vpop.f32.mrf.mxu0
        %v904 = vadd.f32 0.0, %v903
        %v905 = vpop.f32.mrf.mxu0
        %v906 = vpop.f32.mrf.mxu0
        %v907 = vpop.f32.mrf.mxu0
        %908 = vdwg.mxu0
        %910 = vrot.lane.b32.xlu0 %v904, 8
        %v911 = vpop.permute.xlu0 %910
        %vm913 = vcmask 130112
        %914 = vst.msk [vmem:[#allocation4] sm:$0xff] %vm913, %v911
        %v915 = vld [vmem:[#allocation2 + $0x8] sm:$0xf]
        %v916 = vld [vmem:[#allocation3] sm:$0xf]
        %917 = vrot.lane.b32.xlu0 %v685, 112
        %v918 = vpop.permute.xlu0 %917
        %v920 = vsel %vm688, %v918, 0
        %v923 = vsel %vm692, %v915, 0
        %925 = vmatprep.subr.bf16.mxu0 0
        %926 = vmatpush1.bf16.msra.mxu0 0
        %927 = vmatprep.subr.bf16.mxu0 0
        %928 = vmatpush1.bf16.msra.mxu0 0
        %929 = vmatprep.subr.bf16.mxu0 0
        %930 = vmatpush1.bf16.msra.mxu0 0
        %931 = vmatprep.subr.bf16.mxu0 0
        %932 = vmatpush1.bf16.msra.mxu0 0
        %933 = vmatprep.subr.bf16.mxu0 0
        %934 = vmatpush1.bf16.msra.mxu0 0
        %935 = vmatprep.subr.bf16.mxu0 0
        %936 = vmatpush1.bf16.msra.mxu0 0
        %937 = vmatprep.subr.bf16.mxu0 0
        %938 = vmatpush1.bf16.msra.mxu0 0
        %939 = vmatprep.subr.bf16.mxu0 0
        %940 = vmatpush1.bf16.msra.mxu0 %v923
        %941 = vmatprep.subr.bf16.mxu0 0
        %942 = vmatpush2.bf16.msra.mxu0 0
        %943 = vmatprep.subr.bf16.mxu0 0
        %944 = vmatpush2.bf16.msra.mxu0 0
        %945 = vmatprep.subr.bf16.mxu0 0
        %946 = vmatpush2.bf16.msra.mxu0 0
        %947 = vmatprep.subr.bf16.mxu0 0
        %948 = vmatpush2.bf16.msra.mxu0 0
        %949 = vmatprep.subr.bf16.mxu0 0
        %950 = vmatpush2.bf16.msra.mxu0 0
        %951 = vmatprep.subr.bf16.mxu0 0
        %952 = vmatpush2.bf16.msra.mxu0 0
        %953 = vmatprep.subr.bf16.mxu0 0
        %954 = vmatpush2.bf16.msra.mxu0 0
        %955 = vmatprep.subr.bf16.mxu0 0
        %956 = vmatpush2.bf16.msra.mxu0 0
        %957 = vmatprep.mubr.bf16.mxu0 0
        %958 = vmatmul.mubr.bf16.gmra.mxu0 %v920
        %v959 = vpop.f32.mrf.mxu0
        %v960 = vadd.f32 0.0, %v959
        %v961 = vpop.f32.mrf.mxu0
        %v962 = vpop.f32.mrf.mxu0
        %v963 = vpop.f32.mrf.mxu0
        %964 = vdwg.mxu0
        %v965 = vsel %vm688, %v960, -inf
        %966 = vmax.xlane.f32.xlu0 %v965
        %v967 = vpop.xlane.xlu0 %966
        %v968 = vsub.f32 %v960, %v967
        %v969 = vmul.f32 %v968, 1.442695
        %v970 = vpow.pop %v969
        %v971 = vsel %vm688, %v970, 0.0
        %972 = vadd.xlane.f32.xlu0 %v971
        %v973 = vpop.xlane.xlu0 %972
        %v974 = vrcp.pop %v973
        %v975 = vmul.f32 %v970, %v974
        %v976 = vpack.c.bf16 %v975, %v975
        %v978 = vunpack.c.l.b16 %v916
        %v979 = vpack.c.b16 %v978, %v978
        %980 = vrot.lane.b32.xlu0 %v979, 112
        %v981 = vpop.permute.xlu0 %980
        %v983 = vsel %vm688, %v976, 0
        %v986 = vsel %vm692, %v981, 0
        %988 = vmatprep.subr.bf16.mxu0 0
        %989 = vmatpush1.bf16.msra.mxu0 0
        %990 = vmatprep.subr.bf16.mxu0 0
        %991 = vmatpush1.bf16.msra.mxu0 0
        %992 = vmatprep.subr.bf16.mxu0 0
        %993 = vmatpush1.bf16.msra.mxu0 0
        %994 = vmatprep.subr.bf16.mxu0 0
        %995 = vmatpush1.bf16.msra.mxu0 0
        %996 = vmatprep.subr.bf16.mxu0 0
        %997 = vmatpush1.bf16.msra.mxu0 0
        %998 = vmatprep.subr.bf16.mxu0 0
        %999 = vmatpush1.bf16.msra.mxu0 0
        %1000 = vmatprep.subr.bf16.mxu0 0
        %1001 = vmatpush1.bf16.msra.mxu0 0
        %1002 = vmatprep.subr.bf16.mxu0 0
        %1003 = vmatpush1.bf16.msra.mxu0 %v986
        %1004 = vmatprep.subr.bf16.mxu0 0
        %1005 = vmatpush2.bf16.msra.mxu0 0
        %1006 = vmatprep.subr.bf16.mxu0 0
        %1007 = vmatpush2.bf16.msra.mxu0 0
        %1008 = vmatprep.subr.bf16.mxu0 0
        %1009 = vmatpush2.bf16.msra.mxu0 0
        %1010 = vmatprep.subr.bf16.mxu0 0
        %1011 = vmatpush2.bf16.msra.mxu0 0
        %1012 = vmatprep.subr.bf16.mxu0 0
        %1013 = vmatpush2.bf16.msra.mxu0 0
        %1014 = vmatprep.subr.bf16.mxu0 0
        %1015 = vmatpush2.bf16.msra.mxu0 0
        %1016 = vmatprep.subr.bf16.mxu0 0
        %1017 = vmatpush2.bf16.msra.mxu0 0
        %1018 = vmatprep.subr.bf16.mxu0 0
        %1019 = vmatpush2.bf16.msra.mxu0 0
        %1020 = vmatprep.mubr.bf16.mxu0 0
        %1021 = vmatmul.mubr.bf16.gmra.mxu0 %v983
        %v1022 = vpop.f32.mrf.mxu0
        %v1023 = vadd.f32 0.0, %v1022
        %v1024 = vpop.f32.mrf.mxu0
        %v1025 = vpop.f32.mrf.mxu0
        %v1026 = vpop.f32.mrf.mxu0
        %1027 = vdwg.mxu0
        %1029 = vrot.lane.b32.xlu0 %v1023, 16
        %v1030 = vpop.permute.xlu0 %1029
        %vm1032 = vcmask 195712
        %1033 = vst.msk [vmem:[#allocation4] sm:$0xff] %vm1032, %v1030
        %v1034 = vld [vmem:[#allocation2 + $0xc] sm:$0xf]
        %v1035 = vld [vmem:[#allocation3] sm:$0xf]
        %1036 = vrot.lane.b32.xlu0 %v685, 104
        %v1037 = vpop.permute.xlu0 %1036
        %v1039 = vsel %vm688, %v1037, 0
        %v1042 = vsel %vm692, %v1034, 0
        %1044 = vmatprep.subr.bf16.mxu0 0
        %1045 = vmatpush1.bf16.msra.mxu0 0
        %1046 = vmatprep.subr.bf16.mxu0 0
        %1047 = vmatpush1.bf16.msra.mxu0 0
        %1048 = vmatprep.subr.bf16.mxu0 0
        %1049 = vmatpush1.bf16.msra.mxu0 0
        %1050 = vmatprep.subr.bf16.mxu0 0
        %1051 = vmatpush1.bf16.msra.mxu0 0
        %1052 = vmatprep.subr.bf16.mxu0 0
        %1053 = vmatpush1.bf16.msra.mxu0 0
        %1054 = vmatprep.subr.bf16.mxu0 0
        %1055 = vmatpush1.bf16.msra.mxu0 0
        %1056 = vmatprep.subr.bf16.mxu0 0
        %1057 = vmatpush1.bf16.msra.mxu0 0
        %1058 = vmatprep.subr.bf16.mxu0 0
        %1059 = vmatpush1.bf16.msra.mxu0 %v1042
        %1060 = vmatprep.subr.bf16.mxu0 0
        %1061 = vmatpush2.bf16.msra.mxu0 0
        %1062 = vmatprep.subr.bf16.mxu0 0
        %1063 = vmatpush2.bf16.msra.mxu0 0
        %1064 = vmatprep.subr.bf16.mxu0 0
        %1065 = vmatpush2.bf16.msra.mxu0 0
        %1066 = vmatprep.subr.bf16.mxu0 0
        %1067 = vmatpush2.bf16.msra.mxu0 0
        %1068 = vmatprep.subr.bf16.mxu0 0
        %1069 = vmatpush2.bf16.msra.mxu0 0
        %1070 = vmatprep.subr.bf16.mxu0 0
        %1071 = vmatpush2.bf16.msra.mxu0 0
        %1072 = vmatprep.subr.bf16.mxu0 0
        %1073 = vmatpush2.bf16.msra.mxu0 0
        %1074 = vmatprep.subr.bf16.mxu0 0
        %1075 = vmatpush2.bf16.msra.mxu0 0
        %1076 = vmatprep.mubr.bf16.mxu0 0
        %1077 = vmatmul.mubr.bf16.gmra.mxu0 %v1039
        %v1078 = vpop.f32.mrf.mxu0
        %v1079 = vadd.f32 0.0, %v1078
        %v1080 = vpop.f32.mrf.mxu0
        %v1081 = vpop.f32.mrf.mxu0
        %v1082 = vpop.f32.mrf.mxu0
        %1083 = vdwg.mxu0
        %v1084 = vsel %vm688, %v1079, -inf
        %1085 = vmax.xlane.f32.xlu0 %v1084
        %v1086 = vpop.xlane.xlu0 %1085
        %v1087 = vsub.f32 %v1079, %v1086
        %v1088 = vmul.f32 %v1087, 1.442695
        %v1089 = vpow.pop %v1088
        %v1090 = vsel %vm688, %v1089, 0.0
        %1091 = vadd.xlane.f32.xlu0 %v1090
        %v1092 = vpop.xlane.xlu0 %1091
        %v1093 = vrcp.pop %v1092
        %v1094 = vmul.f32 %v1089, %v1093
        %v1095 = vpack.c.bf16 %v1094, %v1094
        %v1097 = vunpack.c.l.b16 %v1035
        %v1098 = vpack.c.b16 %v1097, %v1097
        %1099 = vrot.lane.b32.xlu0 %v1098, 104
        %v1100 = vpop.permute.xlu0 %1099
        %v1102 = vsel %vm688, %v1095, 0
        %v1105 = vsel %vm692, %v1100, 0
        %1107 = vmatprep.subr.bf16.mxu0 0
        %1108 = vmatpush1.bf16.msra.mxu0 0
        %1109 = vmatprep.subr.bf16.mxu0 0
        %1110 = vmatpush1.bf16.msra.mxu0 0
        %1111 = vmatprep.subr.bf16.mxu0 0
        %1112 = vmatpush1.bf16.msra.mxu0 0
        %1113 = vmatprep.subr.bf16.mxu0 0
        %1114 = vmatpush1.bf16.msra.mxu0 0
        %1115 = vmatprep.subr.bf16.mxu0 0
        %1116 = vmatpush1.bf16.msra.mxu0 0
        %1117 = vmatprep.subr.bf16.mxu0 0
        %1118 = vmatpush1.bf16.msra.mxu0 0
        %1119 = vmatprep.subr.bf16.mxu0 0
        %1120 = vmatpush1.bf16.msra.mxu0 0
        %1121 = vmatprep.subr.bf16.mxu0 0
        %1122 = vmatpush1.bf16.msra.mxu0 %v1105
        %1123 = vmatprep.subr.bf16.mxu0 0
        %1124 = vmatpush2.bf16.msra.mxu0 0
        %1125 = vmatprep.subr.bf16.mxu0 0
        %1126 = vmatpush2.bf16.msra.mxu0 0
        %1127 = vmatprep.subr.bf16.mxu0 0
        %1128 = vmatpush2.bf16.msra.mxu0 0
        %1129 = vmatprep.subr.bf16.mxu0 0
        %1130 = vmatpush2.bf16.msra.mxu0 0
        %1131 = vmatprep.subr.bf16.mxu0 0
        %1132 = vmatpush2.bf16.msra.mxu0 0
        %1133 = vmatprep.subr.bf16.mxu0 0
        %1134 = vmatpush2.bf16.msra.mxu0 0
        %1135 = vmatprep.subr.bf16.mxu0 0
        %1136 = vmatpush2.bf16.msra.mxu0 0
        %1137 = vmatprep.subr.bf16.mxu0 0
        %1138 = vmatpush2.bf16.msra.mxu0 0
        %1139 = vmatprep.mubr.bf16.mxu0 0
        %1140 = vmatmul.mubr.bf16.gmra.mxu0 %v1102
        %v1141 = vpop.f32.mrf.mxu0
        %v1142 = vadd.f32 0.0, %v1141
        %v1143 = vpop.f32.mrf.mxu0
        %v1144 = vpop.f32.mrf.mxu0
        %v1145 = vpop.f32.mrf.mxu0
        %1146 = vdwg.mxu0
        %1148 = vrot.lane.b32.xlu0 %v1142, 24
        %v1149 = vpop.permute.xlu0 %1148
        %vm1151 = vcmask 261312
        %1152 = vst.msk [vmem:[#allocation4] sm:$0xff] %vm1151, %v1149
        %v1153 = vld [vmem:[#allocation4] sm:$0xff]
        %v1154 = vpack.c.bf16 %v1153, %v1153
        %v1155 = vld [vmem:[#allocation13] sm:$0xf]
        %v1156 = vld [vmem:[#allocation13 + $0x4] sm:$0xf]
        %v1157 = vld [vmem:[#allocation13 + $0x8] sm:$0xf]
        %v1158 = vld [vmem:[#allocation13 + $0xc] sm:$0xf]
        %v1159 = vld [vmem:[%s8] sm:$0x1]
        %v1161 = vlaneseq
        %v1162 = vshrl.u32 %v1161, 7
        %v1163 = vsub.s32 0, %v1162
        %v1164 = vrot.slane %v1159, %v1163
        %v1170 = vunpack.c.l.b16 %v1155
        %v1171 = vunpack.c.l.b16 %v1156
        %v1172 = vunpack.c.l.b16 %v1157
        %v1173 = vunpack.c.l.b16 %v1158
        %v1174 = vpack.c.b16 %v1171, %v1170
        %v1175 = vpack.c.b16 %v1173, %v1172
        %v1179 = vsel %vm641, %v1154, 0
        %1181 = vmatprep.subr.bf16.mxu0 0
        %1182 = vmatpush1.bf16.msra.mxu0 0
        %1183 = vmatprep.subr.bf16.mxu0 0
        %1184 = vmatpush1.bf16.msra.mxu0 0
        %1185 = vmatprep.subr.bf16.mxu0 0
        %1186 = vmatpush1.bf16.msra.mxu0 0
        %1187 = vmatprep.subr.bf16.mxu0 0
        %1188 = vmatpush1.bf16.msra.mxu0 0
        %1189 = vmatprep.subr.bf16.mxu0 0
        %1190 = vmatpush1.bf16.msra.mxu0 0
        %1191 = vmatprep.subr.bf16.mxu0 0
        %1192 = vmatpush1.bf16.msra.mxu0 0
        %1193 = vmatprep.subr.bf16.mxu0 0
        %1194 = vmatpush1.bf16.msra.mxu0 %v1175
        %1195 = vmatprep.subr.bf16.mxu0 0
        %1196 = vmatpush1.bf16.msra.mxu0 %v1174
        %1197 = vmatprep.subr.bf16.mxu0 0
        %1198 = vmatpush2.bf16.msra.mxu0 0
        %1199 = vmatprep.subr.bf16.mxu0 0
        %1200 = vmatpush2.bf16.msra.mxu0 0
        %1201 = vmatprep.subr.bf16.mxu0 0
        %1202 = vmatpush2.bf16.msra.mxu0 0
        %1203 = vmatprep.subr.bf16.mxu0 0
        %1204 = vmatpush2.bf16.msra.mxu0 0
        %1205 = vmatprep.subr.bf16.mxu0 0
        %1206 = vmatpush2.bf16.msra.mxu0 0
        %1207 = vmatprep.subr.bf16.mxu0 0
        %1208 = vmatpush2.bf16.msra.mxu0 0
        %1209 = vmatprep.subr.bf16.mxu0 0
        %1210 = vmatpush2.bf16.msra.mxu0 0
        %1211 = vmatprep.subr.bf16.mxu0 0
        %1212 = vmatpush2.bf16.msra.mxu0 0
        %1213 = vmatprep.mubr.bf16.mxu0 0
        %1214 = vmatmul.mubr.bf16.gmra.mxu0 %v1179
        %v1215 = vpop.f32.mrf.mxu0
        %v1216 = vadd.f32 %v1164, %v1215
        %v1217 = vpop.f32.mrf.mxu0
        %v1218 = vpop.f32.mrf.mxu0
        %v1219 = vpop.f32.mrf.mxu0
        %1220 = vdwg.mxu0
        %1221 = vst.msk [vmem:[%s419] sm:$0xff] %vm641, %v1216
        %s1222 = sand.u32 %s244, 1
        %s1223 = scalar_lea.sflag [#allocation7], %s1222
        %s1224 = sand.u32 %s244, 1
        %s1225 = smul.addr %s1224, 8
        %s1226 = scalar_lea.vmem [#allocation14], %s1225
        // Predicated region
        $region81: #{tpu_custom_call.1} parent=55 // pred_check
          %p1227 = pneg %p254
        $region82: #{tpu_custom_call.1} parent=55 // pred_check_branch
          %1229 = sbr.rel (%p1227) target = $region84
        $region83: #{tpu_custom_call.1} parent=55 // pred_region
          %s1231 = ssub.s32 128, 128
          %1232 = vsyncadd %s1223, %s1231
          %s1233 = sadd.s32 %s33, %s32
          %s1234 = smul.addr %s1233, 128
          %s1235 = scalar_lea.hbm %s9, %s1234
          %s1237 = sshll.u32 %s1226, 4
          %s1238 = int_to_ptr.vmem [resolvable:$true] %s1237
          %1240 = dma.vmem_to_hbm [thread:$0]  %s1238, 128, %s1235, %s1223
        $region84: #{tpu_custom_call.1} parent=55 // pred_fallthru
          _
      $region56: #{tpu_custom_call.1} parent=5 // pred_fallthru
        _
      %p1241 = scmp.le.s32.totalorder 2, %s23
      // Predicated region
      $region85: #{tpu_custom_call.1} parent=5 // pred_check
        %p1242 = pneg %p1241
      $region86: #{tpu_custom_call.1} parent=5 // pred_check_branch
        %1244 = sbr.rel (%p1242) target = $region88
      $region87: #{tpu_custom_call.1} parent=5 // pred_region
        %s1245 = ssub.s32 %s23, 2
        // Predicated region
        $region89: #{tpu_custom_call.1} parent=87 // pred_check
          %p1246 = pneg %p260
        $region90: #{tpu_custom_call.1} parent=87 // pred_check_branch
          %1248 = sbr.rel (%p1246) target = $region92
        $region91: #{tpu_custom_call.1} parent=87 // pred_region
          %s1249 = sand.u32 %s245, 1
          %s1250 = scalar_lea.sflag [#allocation7], %s1249
          %s1251 = sand.u32 %s245, 1
          %s1252 = smul.addr %s1251, 8
          %s1253 = scalar_lea.vmem [#allocation14], %s1252
          %1254 = dma.done %s1250, 128
        $region92: #{tpu_custom_call.1} parent=87 // pred_fallthru
          _
      $region88: #{tpu_custom_call.1} parent=5 // pred_fallthru
        _
    $region6: #{tpu_custom_call.1} parent=1 // loop_footer
      %s27 = sadd.s32 1, %s23
    $region7: #{tpu_custom_call.1} parent=1 // loop_footer_branch
      %22 = sbr.rel target = $region3
    $region8: #{tpu_custom_call.1} parent=1 // loop_exit
      _
    %1255 = vsyncpa [#allocation6], 1
    %s1256 = scalar_lea.sflag [#allocation6], 1
    %1257 = vsyncpa %s1256, 1
    %1258 = vsyncpa [#allocation9], 1
    %1259 = vsyncpa [#allocation12], 1
    %1260 = vsyncpa [#allocation7], 1
    %s1261 = scalar_lea.sflag [#allocation7], 1
    %1262 = vsyncpa %s1261, 1

</llo_original>
